<compile_context>
chip_gen: v7x
topology: tpu7x:2x2x1
jax: 0.10.0
libtpu: 0.0.40
codegen_flags: <defaults>
</compile_context>

<pallas_src>
import functools

import jax
import jax.numpy as jnp
from jax import lax
from jax.experimental import pallas as pl
from jax.experimental.pallas import tpu as pltpu


# ----------------------------- fused Pallas kernel --------------------------

def _gnn_encoder_fused_kernel(x_ref, h_ref, ht_ref, m_ref,
                              w_first_ref, w_conv_ref, w_lin_ref, w_ab_ref,
                              wc_ref, b_hid_ref, b_lin_ref, b_ab_ref, o_ref):
    f32, bf16 = jnp.float32, jnp.bfloat16
    TP = o_ref.shape[1]            # lane-padded readout width
    D = wc_ref.shape[1]            # attention hidden dim
    M = m_ref[...]                 # [G, N] graph membership mask (f32 0/1)
    neg = jnp.float32(-1e30)
    trans_b = (((1,), (1,)), ((), ()))   # A @ B^T contraction (q·k^T style)

    def readout_and_pool(x_b, col0):
        # z = Linear(x): this layer's readout weights live in w_lin[:, col0:col0+TP]
        z = jnp.dot(x_b, w_lin_ref[:, col0:col0 + TP], preferred_element_type=f32)
        z = (z + b_lin_ref[:, col0:col0 + TP]).astype(bf16)              # [N, TP]
        # Attn_Net_Gated gate: Wc(tanh(Wa z) * sigmoid(Wb z))
        a = jnp.tanh(jnp.dot(z, w_ab_ref[:, :D], preferred_element_type=f32)
                     + b_ab_ref[:, :D])
        g = jax.nn.sigmoid(jnp.dot(z, w_ab_ref[:, D:], preferred_element_type=f32)
                           + b_ab_ref[:, D:])
        ab = (a * g).astype(bf16)                                        # [N, D]
        # gate[v] = wc . ab[v]; attention_c bias is dropped: the per-graph
        # softmax below is invariant to a constant shift of every gate score.
        gate = lax.dot_general(wc_ref[...], ab, trans_b,
                               preferred_element_type=f32)               # [1, N]
        # per-graph (segment) softmax of the gate, then weighted sum of z
        s = jnp.where(M > 0, gate, neg)                                  # [G, N]
        e = jnp.where(M > 0, jnp.exp(s - jnp.max(s, axis=1, keepdims=True)), 0.0)
        denom = jnp.sum(e, axis=1, keepdims=True)
        inv = jnp.where(denom > 0, pl.reciprocal(denom, approx=True), 0.0)
        p = (e * inv).astype(bf16)                                       # [G, N]
        return jnp.dot(p, z, preferred_element_type=f32)                 # [G, TP]

    # ---- layer 0: x1 = ReLU(BN(Linear(x)))  (BN folded into the Linear) ----
    x1 = jnp.dot(x_ref[...], w_first_ref[...], preferred_element_type=f32)
    x1b = jnp.maximum(x1 + b_hid_ref[0:1, :], 0.0).astype(bf16)          # [N, HID]
    out = readout_and_pool(x1b, 0)

    # ---- layer 1: HypergraphConv(x1, H) = D^-1 H B^-1 H^T (x1 W) + bias ----
    xp = jnp.dot(x1b, w_conv_ref[...], preferred_element_type=f32)       # [N, HID]
    deg_v = jnp.sum(h_ref[...].astype(f32), axis=1, keepdims=True)       # [N, 1]
    deg_e = jnp.sum(ht_ref[...].astype(f32), axis=1, keepdims=True)      # [E, 1]
    d_inv = jnp.where(deg_v > 0, pl.reciprocal(deg_v, approx=True), 0.0)
    b_inv = jnp.where(deg_e > 0, pl.reciprocal(deg_e, approx=True), 0.0)
    # node -> hyperedge aggregation (canonical MXU matmul thanks to the H^T input)
    edge_msg = jnp.dot(ht_ref[...], xp.astype(bf16),
                       preferred_element_type=f32) * b_inv               # [E, HID]
    x2 = jnp.dot(h_ref[...], edge_msg.astype(bf16),
                 preferred_element_type=f32) * d_inv + b_hid_ref[1:2, :] # [N, HID]
    out = out + readout_and_pool(x2.astype(bf16), TP)

    o_ref[...] = out


def _zero_map(ndim, i):
    return (0,) * ndim


# ------------------------------ parameters ----------------------------------

def _linear_params(key, fan_in, fan_out):
    kw, kb = jax.random.split(key)
    bound = 1.0 / float(fan_in) ** 0.5
    w = jax.random.uniform(kw, (fan_in, fan_out), jnp.float32, -bound, bound)
    b = jax.random.uniform(kb, (1, fan_out), jnp.float32, -bound, bound)
    return w, b


def init_params(key, f_dim, hid, t_dim, d_attn):
    ks = jax.random.split(key, 8)
    p = {}
    # first_h: Linear(f_dim, hid) + BatchNorm1d(hid) + ReLU
    p['first_w'], p['first_b'] = _linear_params(ks[0], f_dim, hid)
    p['bn_gamma'] = jnp.ones((hid,), jnp.float32)
    p['bn_beta'] = jnp.zeros((hid,), jnp.float32)
    p['bn_mean'] = jnp.zeros((hid,), jnp.float32)
    p['bn_var'] = jnp.ones((hid,), jnp.float32)
    # per-layer readout Linears(hid, dim_target)
    p['lin0_w'], p['lin0_b'] = _linear_params(ks[1], hid, t_dim)
    p['lin1_w'], p['lin1_b'] = _linear_params(ks[2], hid, t_dim)
    # HypergraphConv(hid, hid): lin has no bias; conv bias is zero-initialized
    p['conv_w'], _ = _linear_params(ks[3], hid, hid)
    p['conv_b'] = jnp.zeros((1, hid), jnp.float32)
    # Attn_Net_Gated(L=dim_target, D=256, n_classes=1)
    p['attn_wa'], p['attn_ba'] = _linear_params(ks[4], t_dim, d_attn)
    p['attn_wb'], p['attn_bb'] = _linear_params(ks[5], t_dim, d_attn)
    p['attn_wc'], p['attn_bc'] = _linear_params(ks[6], d_attn, 1)
    return p


# ------------------------------ forward pass ---------------------------------

def gnn_encoder_forward(params, x, edge_index, batch, num_graphs, num_hyperedges):
    N = x.shape[0]
    G = int(num_graphs)
    T = params['lin0_w'].shape[1]
    TP = ((T + 127) // 128) * 128           # lane-dense (128-wide) readout width
    f32, bf16 = jnp.float32, jnp.bfloat16

    # --- glue: dense incidence H [N,E], its transpose, graph membership M ---
    H = jnp.zeros((N, num_hyperedges), f32).at[
        edge_index[0], edge_index[1]].set(1.0)
    M = (batch[None, :] == jnp.arange(G)[:, None]).astype(f32)

    # --- fold BatchNorm1d (inference) into the first Linear ---
    eps = 1e-5
    inv_std = params['bn_gamma'] / jnp.sqrt(params['bn_var'] + eps)
    w_first = (params['first_w'] * inv_std[None, :]).astype(bf16)
    b_first = ((params['first_b'] - params['bn_mean'][None, :]) * inv_std[None, :]
               + params['bn_beta'][None, :])

    # --- pack / pad parameters (readout dim T -> TP lanes, zero padding) ---
    def pad_cols(a):   # [r, T] -> [r, TP]
        return jnp.pad(a, ((0, 0), (0, TP - a.shape[1])))

    def pad_rows(a):   # [T, c] -> [TP, c]
        return jnp.pad(a, ((0, TP - a.shape[0]), (0, 0)))

    w_lin = jnp.concatenate([pad_cols(params['lin0_w']),
                             pad_cols(params['lin1_w'])], axis=1).astype(bf16)
    b_lin = jnp.concatenate([pad_cols(params['lin0_b']),
                             pad_cols(params['lin1_b'])], axis=1)
    w_ab = jnp.concatenate([pad_rows(params['attn_wa']),
                            pad_rows(params['attn_wb'])], axis=1).astype(bf16)
    b_ab = jnp.concatenate([params['attn_ba'], params['attn_bb']], axis=1)
    wc_row = params['attn_wc'].T.astype(bf16)                      # [1, D]
    # attn_bc is intentionally unused: the per-graph softmax is invariant to
    # adding the same constant to every node's gate score (exact equivalence).
    b_hid = jnp.concatenate([b_first, params['conv_b']], axis=0)   # [2, HID]

    args = (x.astype(bf16), H.astype(bf16), H.T.astype(bf16), M,
            w_first, params['conv_w'].astype(bf16), w_lin, w_ab, wc_row,
            b_hid, b_lin, b_ab)

    out_pad = pl.pallas_call(
        _gnn_encoder_fused_kernel,
        out_shape=jax.ShapeDtypeStruct((G, TP), f32),
        grid=(1,),
        in_specs=[pl.BlockSpec(a.shape, functools.partial(_zero_map, a.ndim))
                  for a in args],
        out_specs=pl.BlockSpec((G, TP), functools.partial(_zero_map, 2)),
        compiler_params=pltpu.CompilerParams(
            dimension_semantics=("arbitrary",)),
    )(*args)

    # TODO(synk): training-mode dropout / batch-statistic BatchNorm not
    # implemented (inference semantics only).
    # TODO(synk): for production graph sizes, tile the node dimension with a
    # "parallel" grid axis (v7x: 2 TensorCores, 64 MiB VMEM) and replace the
    # dense H/M blocks with scalar-prefetched sparse edge_index / segment
    # offsets instead of materializing N*E incidence.
    return out_pad[:, :T]


# --------------------------------- driver ------------------------------------

if __name__ == "__main__":
    N, E, G = 64, 16, 4                          # nodes, hyperedges, graphs
    F_DIM, HID, T_DIM, D_ATTN = 64, 64, 32, 256  # features, layer width, target, attn D

    key = jax.random.PRNGKey(0)
    k_x, k_edge, k_params = jax.random.split(key, 3)

    x = jax.random.normal(k_x, (N, F_DIM), jnp.float32)

    # synthetic hyperedge_index: 4 incident nodes per hyperedge, PyG format (2, nnz)
    nodes_per_edge = 4
    edge_nodes = jax.random.randint(k_edge, (nodes_per_edge * E,), 0, N)
    edge_ids = jnp.repeat(jnp.arange(E, dtype=jnp.int32), nodes_per_edge)
    edge_index = jnp.stack([edge_nodes.astype(jnp.int32), edge_ids])

    # node -> graph assignment (contiguous, G graphs of N//G nodes each)
    batch = jnp.repeat(jnp.arange(G, dtype=jnp.int32), N // G)

    params = init_params(k_params, F_DIM, HID, T_DIM, D_ATTN)

    out = gnn_encoder_forward(params, x, edge_index, batch, G, E)
    out = jax.block_until_ready(out)
    assert out.shape == (G, T_DIM)
    assert bool(jnp.all(jnp.isfinite(out)))
    print("KERNEL_OK")
</pallas_src>

<mosaic_0001>
module attributes {stable_mosaic.version = 11 : i64} {
  func.func @_gnn_encoder_fused_kernel(%arg0: i32, %arg1: memref<64x64xbf16, #tpu.memory_space<vmem>>, %arg2: memref<64x16xbf16, #tpu.memory_space<vmem>>, %arg3: memref<16x64xbf16, #tpu.memory_space<vmem>>, %arg4: memref<4x64xf32, #tpu.memory_space<vmem>>, %arg5: memref<64x64xbf16, #tpu.memory_space<vmem>>, %arg6: memref<64x64xbf16, #tpu.memory_space<vmem>>, %arg7: memref<64x256xbf16, #tpu.memory_space<vmem>>, %arg8: memref<128x512xbf16, #tpu.memory_space<vmem>>, %arg9: memref<1x256xbf16, #tpu.memory_space<vmem>>, %arg10: memref<2x64xf32, #tpu.memory_space<vmem>>, %arg11: memref<1x256xf32, #tpu.memory_space<vmem>>, %arg12: memref<1x512xf32, #tpu.memory_space<vmem>>, %arg13: memref<4x128xf32, #tpu.memory_space<vmem>>) attributes {dimension_semantics = [#tpu.dimension_semantics<arbitrary>], iteration_bounds = array<i64: 1>, scalar_prefetch = 0 : i64, scratch_operands = 0 : i64, tpu.core_type = #tpu.core_type<tc>, window_params = [{pipeline_mode = #tpu.pipeline_mode<synchronous>, transform_indices = @transform_0, window_bounds = array<i64: 64, 64>}, {pipeline_mode = #tpu.pipeline_mode<synchronous>, transform_indices = @transform_1, window_bounds = array<i64: 64, 16>}, {pipeline_mode = #tpu.pipeline_mode<synchronous>, transform_indices = @transform_2, window_bounds = array<i64: 16, 64>}, {pipeline_mode = #tpu.pipeline_mode<synchronous>, transform_indices = @transform_3, window_bounds = array<i64: 4, 64>}, {pipeline_mode = #tpu.pipeline_mode<synchronous>, transform_indices = @transform_4, window_bounds = array<i64: 64, 64>}, {pipeline_mode = #tpu.pipeline_mode<synchronous>, transform_indices = @transform_5, window_bounds = array<i64: 64, 64>}, {pipeline_mode = #tpu.pipeline_mode<synchronous>, transform_indices = @transform_6, window_bounds = array<i64: 64, 256>}, {pipeline_mode = #tpu.pipeline_mode<synchronous>, transform_indices = @transform_7, window_bounds = array<i64: 128, 512>}, {pipeline_mode = #tpu.pipeline_mode<synchronous>, transform_indices = @transform_8, window_bounds = array<i64: 1, 256>}, {pipeline_mode = #tpu.pipeline_mode<synchronous>, transform_indices = @transform_9, window_bounds = array<i64: 2, 64>}, {pipeline_mode = #tpu.pipeline_mode<synchronous>, transform_indices = @transform_10, window_bounds = array<i64: 1, 256>}, {pipeline_mode = #tpu.pipeline_mode<synchronous>, transform_indices = @transform_11, window_bounds = array<i64: 1, 512>}, {pipeline_mode = #tpu.pipeline_mode<synchronous>, transform_indices = @transform_12, window_bounds = array<i64: 4, 128>}]} {
    %c0 = arith.constant 0 : index
    %c0_0 = arith.constant 0 : index
    %0 = vector.load %arg4[%c0, %c0_0] : memref<4x64xf32, #tpu.memory_space<vmem>>, vector<4x64xf32>
    %c0_1 = arith.constant 0 : index
    %c0_2 = arith.constant 0 : index
    %1 = vector.load %arg1[%c0_1, %c0_2] : memref<64x64xbf16, #tpu.memory_space<vmem>>, vector<64x64xbf16>
    %c0_3 = arith.constant 0 : index
    %c0_4 = arith.constant 0 : index
    %2 = vector.load %arg5[%c0_3, %c0_4] : memref<64x64xbf16, #tpu.memory_space<vmem>>, vector<64x64xbf16>
    %cst = arith.constant dense<0.000000e+00> : vector<64x64xf32>
    %3 = tpu.matmul %1, %2, %cst {dimension_numbers = #tpu.dot_dimension_numbers<[1], [0], [0], [1], [0, 0, 1, 1], [], []>} : vector<64x64xbf16>, vector<64x64xbf16>, vector<64x64xf32> -> vector<64x64xf32>
    %c0_5 = arith.constant 0 : index
    %c0_6 = arith.constant 0 : index
    %4 = vector.load %arg10[%c0_5, %c0_6] : memref<2x64xf32, #tpu.memory_space<vmem>>, vector<1x64xf32>
    %5 = vector.broadcast %4 : vector<1x64xf32> to vector<64x64xf32>
    %6 = arith.addf %3, %5 : vector<64x64xf32>
    %cst_7 = arith.constant 0.000000e+00 : f32
    %7 = vector.broadcast %cst_7 : f32 to vector<64x64xf32>
    %8 = arith.maximumf %6, %7 : vector<64x64xf32>
    %9 = arith.truncf %8 : vector<64x64xf32> to vector<64x64xbf16>
    %c0_8 = arith.constant 0 : index
    %c0_9 = arith.constant 0 : index
    %10 = vector.load %arg7[%c0_8, %c0_9] : memref<64x256xbf16, #tpu.memory_space<vmem>>, vector<64x128xbf16>
    %cst_10 = arith.constant dense<0.000000e+00> : vector<64x128xf32>
    %11 = tpu.matmul %9, %10, %cst_10 {dimension_numbers = #tpu.dot_dimension_numbers<[1], [0], [0], [1], [0, 0, 1, 1], [], []>} : vector<64x64xbf16>, vector<64x128xbf16>, vector<64x128xf32> -> vector<64x128xf32>
    %c0_11 = arith.constant 0 : index
    %c0_12 = arith.constant 0 : index
    %12 = vector.load %arg11[%c0_11, %c0_12] : memref<1x256xf32, #tpu.memory_space<vmem>>, vector<1x128xf32>
    %13 = vector.broadcast %12 : vector<1x128xf32> to vector<64x128xf32>
    %14 = arith.addf %11, %13 : vector<64x128xf32>
    %15 = arith.truncf %14 : vector<64x128xf32> to vector<64x128xbf16>
    %c0_13 = arith.constant 0 : index
    %c0_14 = arith.constant 0 : index
    %16 = vector.load %arg8[%c0_13, %c0_14] : memref<128x512xbf16, #tpu.memory_space<vmem>>, vector<128x256xbf16>
    %cst_15 = arith.constant dense<0.000000e+00> : vector<64x256xf32>
    %17 = tpu.matmul %15, %16, %cst_15 {dimension_numbers = #tpu.dot_dimension_numbers<[1], [0], [0], [1], [0, 0, 1, 1], [], []>} : vector<64x128xbf16>, vector<128x256xbf16>, vector<64x256xf32> -> vector<64x256xf32>
    %c0_16 = arith.constant 0 : index
    %c0_17 = arith.constant 0 : index
    %18 = vector.load %arg12[%c0_16, %c0_17] : memref<1x512xf32, #tpu.memory_space<vmem>>, vector<1x256xf32>
    %19 = vector.broadcast %18 : vector<1x256xf32> to vector<64x256xf32>
    %20 = arith.addf %17, %19 : vector<64x256xf32>
    %21 = math.tanh %20 : vector<64x256xf32>
    %c0_18 = arith.constant 0 : index
    %c256 = arith.constant 256 : index
    %22 = vector.load %arg8[%c0_18, %c256] : memref<128x512xbf16, #tpu.memory_space<vmem>>, vector<128x256xbf16>
    %cst_19 = arith.constant dense<0.000000e+00> : vector<64x256xf32>
    %23 = tpu.matmul %15, %22, %cst_19 {dimension_numbers = #tpu.dot_dimension_numbers<[1], [0], [0], [1], [0, 0, 1, 1], [], []>} : vector<64x128xbf16>, vector<128x256xbf16>, vector<64x256xf32> -> vector<64x256xf32>
    %c0_20 = arith.constant 0 : index
    %c256_21 = arith.constant 256 : index
    %24 = vector.load %arg12[%c0_20, %c256_21] : memref<1x512xf32, #tpu.memory_space<vmem>>, vector<1x256xf32>
    %25 = vector.broadcast %24 : vector<1x256xf32> to vector<64x256xf32>
    %26 = arith.addf %23, %25 : vector<64x256xf32>
    %27 = arith.negf %26 : vector<64x256xf32>
    %28 = math.exp %27 : vector<64x256xf32>
    %cst_22 = arith.constant 1.000000e+00 : f32
    %29 = vector.broadcast %cst_22 : f32 to vector<64x256xf32>
    %30 = arith.addf %29, %28 : vector<64x256xf32>
    %31 = arith.divf %29, %30 : vector<64x256xf32>
    %32 = arith.mulf %21, %31 : vector<64x256xf32>
    %33 = arith.truncf %32 : vector<64x256xf32> to vector<64x256xbf16>
    %c0_23 = arith.constant 0 : index
    %c0_24 = arith.constant 0 : index
    %34 = vector.load %arg9[%c0_23, %c0_24] : memref<1x256xbf16, #tpu.memory_space<vmem>>, vector<1x256xbf16>
    %cst_25 = arith.constant dense<0.000000e+00> : vector<1x64xf32>
    %35 = tpu.matmul %34, %33, %cst_25 {dimension_numbers = #tpu.dot_dimension_numbers<[1], [1], [0], [0], [0, 0, 1, 0], [], []>} : vector<1x256xbf16>, vector<64x256xbf16>, vector<1x64xf32> -> vector<1x64xf32>
    %cst_26 = arith.constant 0.000000e+00 : f32
    %36 = vector.broadcast %cst_26 : f32 to vector<4x64xf32>
    %37 = arith.cmpf ogt, %0, %36 : vector<4x64xf32>
    %cst_27 = arith.constant -1.000000e+30 : f32
    %38 = vector.shape_cast %35 : vector<1x64xf32> to vector<1x64xf32>
    %39 = vector.broadcast %38 : vector<1x64xf32> to vector<4x64xf32>
    %40 = vector.broadcast %cst_27 : f32 to vector<4x64xf32>
    %41 = arith.select %37, %39, %40 : vector<4x64xi1>, vector<4x64xf32>
    %cst_28 = arith.constant 0.000000e+00 : f32
    %42 = vector.broadcast %cst_28 : f32 to vector<4x64xf32>
    %43 = arith.cmpf ogt, %0, %42 : vector<4x64xf32>
    %cst_29 = arith.constant dense<0xFF800000> : vector<4xf32>
    %44 = vector.multi_reduction <maximumf>, %41, %cst_29 [1] : vector<4x64xf32> to vector<4xf32>
    %45 = vector.shape_cast %44 : vector<4xf32> to vector<4x1xf32>
    %46 = vector.broadcast %45 : vector<4x1xf32> to vector<4x64xf32>
    %47 = arith.subf %41, %46 : vector<4x64xf32>
    %48 = math.exp %47 : vector<4x64xf32>
    %cst_30 = arith.constant 0.000000e+00 : f32
    %49 = vector.broadcast %cst_30 : f32 to vector<4x64xf32>
    %50 = arith.select %43, %48, %49 : vector<4x64xi1>, vector<4x64xf32>
    %cst_31 = arith.constant dense<0.000000e+00> : vector<4xf32>
    %51 = vector.multi_reduction <add>, %50, %cst_31 [1] : vector<4x64xf32> to vector<4xf32>
    %52 = vector.shape_cast %51 : vector<4xf32> to vector<4x1xf32>
    %cst_32 = arith.constant 0.000000e+00 : f32
    %53 = vector.broadcast %cst_32 : f32 to vector<4x1xf32>
    %54 = arith.cmpf ogt, %52, %53 : vector<4x1xf32>
    %55 = tpu.reciprocal %52 {approx = true} : vector<4x1xf32> -> vector<4x1xf32>
    %cst_33 = arith.constant 0.000000e+00 : f32
    %56 = vector.broadcast %cst_33 : f32 to vector<4x1xf32>
    %57 = arith.select %54, %55, %56 : vector<4x1xi1>, vector<4x1xf32>
    %58 = vector.broadcast %57 : vector<4x1xf32> to vector<4x64xf32>
    %59 = arith.mulf %50, %58 : vector<4x64xf32>
    %60 = arith.truncf %59 : vector<4x64xf32> to vector<4x64xbf16>
    %cst_34 = arith.constant dense<0.000000e+00> : vector<4x128xf32>
    %61 = tpu.matmul %60, %15, %cst_34 {dimension_numbers = #tpu.dot_dimension_numbers<[1], [0], [0], [1], [0, 0, 1, 1], [], []>} : vector<4x64xbf16>, vector<64x128xbf16>, vector<4x128xf32> -> vector<4x128xf32>
    %c0_35 = arith.constant 0 : index
    %c0_36 = arith.constant 0 : index
    %62 = vector.load %arg6[%c0_35, %c0_36] : memref<64x64xbf16, #tpu.memory_space<vmem>>, vector<64x64xbf16>
    %cst_37 = arith.constant dense<0.000000e+00> : vector<64x64xf32>
    %63 = tpu.matmul %9, %62, %cst_37 {dimension_numbers = #tpu.dot_dimension_numbers<[1], [0], [0], [1], [0, 0, 1, 1], [], []>} : vector<64x64xbf16>, vector<64x64xbf16>, vector<64x64xf32> -> vector<64x64xf32>
    %c0_38 = arith.constant 0 : index
    %c0_39 = arith.constant 0 : index
    %64 = vector.load %arg2[%c0_38, %c0_39] : memref<64x16xbf16, #tpu.memory_space<vmem>>, vector<64x16xbf16>
    %65 = arith.extf %64 : vector<64x16xbf16> to vector<64x16xf32>
    %cst_40 = arith.constant dense<0.000000e+00> : vector<64xf32>
    %66 = vector.multi_reduction <add>, %65, %cst_40 [1] : vector<64x16xf32> to vector<64xf32>
    %67 = vector.shape_cast %66 : vector<64xf32> to vector<64x1xf32>
    %c0_41 = arith.constant 0 : index
    %c0_42 = arith.constant 0 : index
    %68 = vector.load %arg3[%c0_41, %c0_42] : memref<16x64xbf16, #tpu.memory_space<vmem>>, vector<16x64xbf16>
    %69 = arith.extf %68 : vector<16x64xbf16> to vector<16x64xf32>
    %cst_43 = arith.constant dense<0.000000e+00> : vector<16xf32>
    %70 = vector.multi_reduction <add>, %69, %cst_43 [1] : vector<16x64xf32> to vector<16xf32>
    %71 = vector.shape_cast %70 : vector<16xf32> to vector<16x1xf32>
    %cst_44 = arith.constant 0.000000e+00 : f32
    %72 = vector.broadcast %cst_44 : f32 to vector<64x1xf32>
    %73 = arith.cmpf ogt, %67, %72 : vector<64x1xf32>
    %74 = tpu.reciprocal %67 {approx = true} : vector<64x1xf32> -> vector<64x1xf32>
    %cst_45 = arith.constant 0.000000e+00 : f32
    %75 = vector.broadcast %cst_45 : f32 to vector<64x1xf32>
    %76 = arith.select %73, %74, %75 : vector<64x1xi1>, vector<64x1xf32>
    %cst_46 = arith.constant 0.000000e+00 : f32
    %77 = vector.broadcast %cst_46 : f32 to vector<16x1xf32>
    %78 = arith.cmpf ogt, %71, %77 : vector<16x1xf32>
    %79 = tpu.reciprocal %71 {approx = true} : vector<16x1xf32> -> vector<16x1xf32>
    %cst_47 = arith.constant 0.000000e+00 : f32
    %80 = vector.broadcast %cst_47 : f32 to vector<16x1xf32>
    %81 = arith.select %78, %79, %80 : vector<16x1xi1>, vector<16x1xf32>
    %c0_48 = arith.constant 0 : index
    %c0_49 = arith.constant 0 : index
    %82 = vector.load %arg3[%c0_48, %c0_49] : memref<16x64xbf16, #tpu.memory_space<vmem>>, vector<16x64xbf16>
    %83 = arith.truncf %63 : vector<64x64xf32> to vector<64x64xbf16>
    %cst_50 = arith.constant dense<0.000000e+00> : vector<16x64xf32>
    %84 = tpu.matmul %82, %83, %cst_50 {dimension_numbers = #tpu.dot_dimension_numbers<[1], [0], [0], [1], [0, 0, 1, 1], [], []>} : vector<16x64xbf16>, vector<64x64xbf16>, vector<16x64xf32> -> vector<16x64xf32>
    %85 = vector.broadcast %81 : vector<16x1xf32> to vector<16x64xf32>
    %86 = arith.mulf %84, %85 : vector<16x64xf32>
    %c0_51 = arith.constant 0 : index
    %c0_52 = arith.constant 0 : index
    %87 = vector.load %arg2[%c0_51, %c0_52] : memref<64x16xbf16, #tpu.memory_space<vmem>>, vector<64x16xbf16>
    %88 = arith.truncf %86 : vector<16x64xf32> to vector<16x64xbf16>
    %cst_53 = arith.constant dense<0.000000e+00> : vector<64x64xf32>
    %89 = tpu.matmul %87, %88, %cst_53 {dimension_numbers = #tpu.dot_dimension_numbers<[1], [0], [0], [1], [0, 0, 1, 1], [], []>} : vector<64x16xbf16>, vector<16x64xbf16>, vector<64x64xf32> -> vector<64x64xf32>
    %90 = vector.broadcast %76 : vector<64x1xf32> to vector<64x64xf32>
    %91 = arith.mulf %89, %90 : vector<64x64xf32>
    %c1 = arith.constant 1 : index
    %c0_54 = arith.constant 0 : index
    %92 = vector.load %arg10[%c1, %c0_54] : memref<2x64xf32, #tpu.memory_space<vmem>>, vector<1x64xf32>
    %93 = vector.broadcast %92 : vector<1x64xf32> to vector<64x64xf32>
    %94 = arith.addf %91, %93 : vector<64x64xf32>
    %95 = arith.truncf %94 : vector<64x64xf32> to vector<64x64xbf16>
    %c0_55 = arith.constant 0 : index
    %c128 = arith.constant 128 : index
    %96 = vector.load %arg7[%c0_55, %c128] : memref<64x256xbf16, #tpu.memory_space<vmem>>, vector<64x128xbf16>
    %cst_56 = arith.constant dense<0.000000e+00> : vector<64x128xf32>
    %97 = tpu.matmul %95, %96, %cst_56 {dimension_numbers = #tpu.dot_dimension_numbers<[1], [0], [0], [1], [0, 0, 1, 1], [], []>} : vector<64x64xbf16>, vector<64x128xbf16>, vector<64x128xf32> -> vector<64x128xf32>
    %c0_57 = arith.constant 0 : index
    %c128_58 = arith.constant 128 : index
    %98 = vector.load %arg11[%c0_57, %c128_58] : memref<1x256xf32, #tpu.memory_space<vmem>>, vector<1x128xf32>
    %99 = vector.broadcast %98 : vector<1x128xf32> to vector<64x128xf32>
    %100 = arith.addf %97, %99 : vector<64x128xf32>
    %101 = arith.truncf %100 : vector<64x128xf32> to vector<64x128xbf16>
    %c0_59 = arith.constant 0 : index
    %c0_60 = arith.constant 0 : index
    %102 = vector.load %arg8[%c0_59, %c0_60] : memref<128x512xbf16, #tpu.memory_space<vmem>>, vector<128x256xbf16>
    %cst_61 = arith.constant dense<0.000000e+00> : vector<64x256xf32>
    %103 = tpu.matmul %101, %102, %cst_61 {dimension_numbers = #tpu.dot_dimension_numbers<[1], [0], [0], [1], [0, 0, 1, 1], [], []>} : vector<64x128xbf16>, vector<128x256xbf16>, vector<64x256xf32> -> vector<64x256xf32>
    %c0_62 = arith.constant 0 : index
    %c0_63 = arith.constant 0 : index
    %104 = vector.load %arg12[%c0_62, %c0_63] : memref<1x512xf32, #tpu.memory_space<vmem>>, vector<1x256xf32>
    %105 = vector.broadcast %104 : vector<1x256xf32> to vector<64x256xf32>
    %106 = arith.addf %103, %105 : vector<64x256xf32>
    %107 = math.tanh %106 : vector<64x256xf32>
    %c0_64 = arith.constant 0 : index
    %c256_65 = arith.constant 256 : index
    %108 = vector.load %arg8[%c0_64, %c256_65] : memref<128x512xbf16, #tpu.memory_space<vmem>>, vector<128x256xbf16>
    %cst_66 = arith.constant dense<0.000000e+00> : vector<64x256xf32>
    %109 = tpu.matmul %101, %108, %cst_66 {dimension_numbers = #tpu.dot_dimension_numbers<[1], [0], [0], [1], [0, 0, 1, 1], [], []>} : vector<64x128xbf16>, vector<128x256xbf16>, vector<64x256xf32> -> vector<64x256xf32>
    %c0_67 = arith.constant 0 : index
    %c256_68 = arith.constant 256 : index
    %110 = vector.load %arg12[%c0_67, %c256_68] : memref<1x512xf32, #tpu.memory_space<vmem>>, vector<1x256xf32>
    %111 = vector.broadcast %110 : vector<1x256xf32> to vector<64x256xf32>
    %112 = arith.addf %109, %111 : vector<64x256xf32>
    %113 = arith.negf %112 : vector<64x256xf32>
    %114 = math.exp %113 : vector<64x256xf32>
    %cst_69 = arith.constant 1.000000e+00 : f32
    %115 = vector.broadcast %cst_69 : f32 to vector<64x256xf32>
    %116 = arith.addf %115, %114 : vector<64x256xf32>
    %117 = arith.divf %115, %116 : vector<64x256xf32>
    %118 = arith.mulf %107, %117 : vector<64x256xf32>
    %119 = arith.truncf %118 : vector<64x256xf32> to vector<64x256xbf16>
    %c0_70 = arith.constant 0 : index
    %c0_71 = arith.constant 0 : index
    %120 = vector.load %arg9[%c0_70, %c0_71] : memref<1x256xbf16, #tpu.memory_space<vmem>>, vector<1x256xbf16>
    %cst_72 = arith.constant dense<0.000000e+00> : vector<1x64xf32>
    %121 = tpu.matmul %120, %119, %cst_72 {dimension_numbers = #tpu.dot_dimension_numbers<[1], [1], [0], [0], [0, 0, 1, 0], [], []>} : vector<1x256xbf16>, vector<64x256xbf16>, vector<1x64xf32> -> vector<1x64xf32>
    %cst_73 = arith.constant 0.000000e+00 : f32
    %122 = vector.broadcast %cst_73 : f32 to vector<4x64xf32>
    %123 = arith.cmpf ogt, %0, %122 : vector<4x64xf32>
    %cst_74 = arith.constant -1.000000e+30 : f32
    %124 = vector.shape_cast %121 : vector<1x64xf32> to vector<1x64xf32>
    %125 = vector.broadcast %124 : vector<1x64xf32> to vector<4x64xf32>
    %126 = vector.broadcast %cst_74 : f32 to vector<4x64xf32>
    %127 = arith.select %123, %125, %126 : vector<4x64xi1>, vector<4x64xf32>
    %cst_75 = arith.constant 0.000000e+00 : f32
    %128 = vector.broadcast %cst_75 : f32 to vector<4x64xf32>
    %129 = arith.cmpf ogt, %0, %128 : vector<4x64xf32>
    %cst_76 = arith.constant dense<0xFF800000> : vector<4xf32>
    %130 = vector.multi_reduction <maximumf>, %127, %cst_76 [1] : vector<4x64xf32> to vector<4xf32>
    %131 = vector.shape_cast %130 : vector<4xf32> to vector<4x1xf32>
    %132 = vector.broadcast %131 : vector<4x1xf32> to vector<4x64xf32>
    %133 = arith.subf %127, %132 : vector<4x64xf32>
    %134 = math.exp %133 : vector<4x64xf32>
    %cst_77 = arith.constant 0.000000e+00 : f32
    %135 = vector.broadcast %cst_77 : f32 to vector<4x64xf32>
    %136 = arith.select %129, %134, %135 : vector<4x64xi1>, vector<4x64xf32>
    %cst_78 = arith.constant dense<0.000000e+00> : vector<4xf32>
    %137 = vector.multi_reduction <add>, %136, %cst_78 [1] : vector<4x64xf32> to vector<4xf32>
    %138 = vector.shape_cast %137 : vector<4xf32> to vector<4x1xf32>
    %cst_79 = arith.constant 0.000000e+00 : f32
    %139 = vector.broadcast %cst_79 : f32 to vector<4x1xf32>
    %140 = arith.cmpf ogt, %138, %139 : vector<4x1xf32>
    %141 = tpu.reciprocal %138 {approx = true} : vector<4x1xf32> -> vector<4x1xf32>
    %cst_80 = arith.constant 0.000000e+00 : f32
    %142 = vector.broadcast %cst_80 : f32 to vector<4x1xf32>
    %143 = arith.select %140, %141, %142 : vector<4x1xi1>, vector<4x1xf32>
    %144 = vector.broadcast %143 : vector<4x1xf32> to vector<4x64xf32>
    %145 = arith.mulf %136, %144 : vector<4x64xf32>
    %146 = arith.truncf %145 : vector<4x64xf32> to vector<4x64xbf16>
    %cst_81 = arith.constant dense<0.000000e+00> : vector<4x128xf32>
    %147 = tpu.matmul %146, %101, %cst_81 {dimension_numbers = #tpu.dot_dimension_numbers<[1], [0], [0], [1], [0, 0, 1, 1], [], []>} : vector<4x64xbf16>, vector<64x128xbf16>, vector<4x128xf32> -> vector<4x128xf32>
    %148 = arith.addf %61, %147 : vector<4x128xf32>
    %c0_82 = arith.constant 0 : index
    %c0_83 = arith.constant 0 : index
    %149 = vector.load %arg13[%c0_82, %c0_83] : memref<4x128xf32, #tpu.memory_space<vmem>>, vector<4x128xf32>
    tpu.vector_store %arg13[%c0_82, %c0_83], %148 {strides = array<i32>} : memref<4x128xf32, #tpu.memory_space<vmem>>, vector<4x128xf32>,
    return
  }
  func.func @transform_0(%arg0: i32) -> (i32, i32) {
    %c0_i32 = arith.constant 0 : i32
    %c0_i32_0 = arith.constant 0 : i32
    %c0_i32_1 = arith.constant 0 : i32
    return %c0_i32, %c0_i32_0 : i32, i32
  }
  func.func @transform_1(%arg0: i32) -> (i32, i32) {
    %c0_i32 = arith.constant 0 : i32
    %c0_i32_0 = arith.constant 0 : i32
    %c0_i32_1 = arith.constant 0 : i32
    return %c0_i32, %c0_i32_0 : i32, i32
  }
  func.func @transform_2(%arg0: i32) -> (i32, i32) {
    %c0_i32 = arith.constant 0 : i32
    %c0_i32_0 = arith.constant 0 : i32
    %c0_i32_1 = arith.constant 0 : i32
    return %c0_i32, %c0_i32_0 : i32, i32
  }
  func.func @transform_3(%arg0: i32) -> (i32, i32) {
    %c0_i32 = arith.constant 0 : i32
    %c0_i32_0 = arith.constant 0 : i32
    %c0_i32_1 = arith.constant 0 : i32
    return %c0_i32, %c0_i32_0 : i32, i32
  }
  func.func @transform_4(%arg0: i32) -> (i32, i32) {
    %c0_i32 = arith.constant 0 : i32
    %c0_i32_0 = arith.constant 0 : i32
    %c0_i32_1 = arith.constant 0 : i32
    return %c0_i32, %c0_i32_0 : i32, i32
  }
  func.func @transform_5(%arg0: i32) -> (i32, i32) {
    %c0_i32 = arith.constant 0 : i32
    %c0_i32_0 = arith.constant 0 : i32
    %c0_i32_1 = arith.constant 0 : i32
    return %c0_i32, %c0_i32_0 : i32, i32
  }
  func.func @transform_6(%arg0: i32) -> (i32, i32) {
    %c0_i32 = arith.constant 0 : i32
    %c0_i32_0 = arith.constant 0 : i32
    %c0_i32_1 = arith.constant 0 : i32
    return %c0_i32, %c0_i32_0 : i32, i32
  }
  func.func @transform_7(%arg0: i32) -> (i32, i32) {
    %c0_i32 = arith.constant 0 : i32
    %c0_i32_0 = arith.constant 0 : i32
    %c0_i32_1 = arith.constant 0 : i32
    return %c0_i32, %c0_i32_0 : i32, i32
  }
  func.func @transform_8(%arg0: i32) -> (i32, i32) {
    %c0_i32 = arith.constant 0 : i32
    %c0_i32_0 = arith.constant 0 : i32
    %c0_i32_1 = arith.constant 0 : i32
    return %c0_i32, %c0_i32_0 : i32, i32
  }
  func.func @transform_9(%arg0: i32) -> (i32, i32) {
    %c0_i32 = arith.constant 0 : i32
    %c0_i32_0 = arith.constant 0 : i32
    %c0_i32_1 = arith.constant 0 : i32
    return %c0_i32, %c0_i32_0 : i32, i32
  }
  func.func @transform_10(%arg0: i32) -> (i32, i32) {
    %c0_i32 = arith.constant 0 : i32
    %c0_i32_0 = arith.constant 0 : i32
    %c0_i32_1 = arith.constant 0 : i32
    return %c0_i32, %c0_i32_0 : i32, i32
  }
  func.func @transform_11(%arg0: i32) -> (i32, i32) {
    %c0_i32 = arith.constant 0 : i32
    %c0_i32_0 = arith.constant 0 : i32
    %c0_i32_1 = arith.constant 0 : i32
    return %c0_i32, %c0_i32_0 : i32, i32
  }
  func.func @transform_12(%arg0: i32) -> (i32, i32) {
    %c0_i32 = arith.constant 0 : i32
    %c0_i32_0 = arith.constant 0 : i32
    %c0_i32_1 = arith.constant 0 : i32
    return %c0_i32, %c0_i32_0 : i32, i32
  }
}

</mosaic_0001>

<llo_original>
// kernel: tpu_custom_call.1
$region0: #{tpu_custom_call.1}
  #allocation0 [shape = 'u32[]', space=smem, size = 0x4, offset = 0x4, fixed_abs, tag = 'smem constant byte address 0x4 - core index']
  #allocation1 [shape = 'u32[144,128]{1,0:T(1,128)}', space=vmem, size = 0x12000, scoped, tag = 'internal scratch']
  %s0 = inlined_call_operand.vmem [shape: bf16[64,64], index: 0, kind: input, shape index: {}]
  %s1 = inlined_call_operand.vmem [shape: bf16[64,16], index: 1, kind: input, shape index: {}]
  %s2 = inlined_call_operand.vmem [shape: bf16[16,64], index: 2, kind: input, shape index: {}]
  %s3 = inlined_call_operand.vmem [shape: f32[4,64], index: 3, kind: input, shape index: {}]
  %s4 = inlined_call_operand.hbm [shape: bf16[64,64], index: 4, kind: input, shape index: {}]
  %s5 = inlined_call_operand.hbm [shape: bf16[64,64], index: 5, kind: input, shape index: {}]
  %s6 = inlined_call_operand.hbm [shape: bf16[64,256], index: 6, kind: input, shape index: {}]
  %s7 = inlined_call_operand.hbm [shape: bf16[128,512], index: 7, kind: input, shape index: {}]
  %s8 = inlined_call_operand.vmem [shape: bf16[1,256], index: 8, kind: input, shape index: {}]
  %s9 = inlined_call_operand.vmem [shape: f32[2,64], index: 9, kind: input, shape index: {}]
  %s10 = inlined_call_operand.vmem [shape: f32[1,256], index: 10, kind: input, shape index: {}]
  %s11 = inlined_call_operand.vmem [shape: f32[1,512], index: 11, kind: input, shape index: {}]
  %s12 = inlined_call_operand.hbm [shape: f32[4,128], index: 12, kind: output, shape index: {}]
  %s13 = sld [smem:[#allocation0]]
  $region74: #{tpu_custom_call.1} parent=0
    _
  %s15 = ssub.s32 1, %s13
  %s16 = scalar_select 0, %s15, %s13
  $region1: #{tpu_custom_call.1} parent=0
    #allocation2 [shape = 'u8[16384]{0}', space=vmem, size = 0x4000, scoped, tag = 'input window, operand 4, single buffered']
    #allocation3 [shape = 's32[1]{0}', space=sflag, size = 0x4, scoped, tag = 'scoped memory for tpu_custom_call.1']
    #allocation4 [shape = 's32[1]{0}', space=sflag, size = 0x4, scoped, tag = 'scoped memory for tpu_custom_call.1']
    #allocation5 [shape = 'u8[16384]{0}', space=vmem, size = 0x4000, scoped, tag = 'input window, operand 5, single buffered']
    #allocation6 [shape = 's32[1]{0}', space=sflag, size = 0x4, scoped, tag = 'scoped memory for tpu_custom_call.1']
    #allocation7 [shape = 'u8[32768]{0}', space=vmem, size = 0x8000, scoped, tag = 'input window, operand 6, single buffered']
    #allocation8 [shape = 'u8[131072]{0}', space=vmem, size = 0x20000, scoped, tag = 'input window, operand 7, single buffered']
    #allocation9 [shape = 's32[1]{0}', space=sflag, size = 0x4, scoped, tag = 'scoped memory for tpu_custom_call.1']
    #allocation10 [shape = 'u8[2048]{0}', space=vmem, size = 0x800, scoped, tag = 'output window, operand 0, single buffered']
    %17 = vsyncpa [#allocation3], 0
    %18 = vsyncpa [#allocation6], 0
    %19 = vsyncpa [#allocation9], 0
    %20 = vsyncpa [#allocation4], 0
    // Predicated region
    $region2: #{tpu_custom_call.1} parent=1 // pred_check
      _
    $region3: #{tpu_custom_call.1} parent=1 // pred_check_branch
      %22 = sbr.rel (0) target = $region5
    $region4: #{tpu_custom_call.1} parent=1 // pred_region
      _
    $region5: #{tpu_custom_call.1} parent=1 // pred_fallthru
      _
    // Predicated region
    $region6: #{tpu_custom_call.1} parent=1 // pred_check
      _
    $region7: #{tpu_custom_call.1} parent=1 // pred_check_branch
      %24 = sbr.rel (0) target = $region9
    $region8: #{tpu_custom_call.1} parent=1 // pred_region
      _
    $region9: #{tpu_custom_call.1} parent=1 // pred_fallthru
      _
    // Predicated region
    $region10: #{tpu_custom_call.1} parent=1 // pred_check
      _
    $region11: #{tpu_custom_call.1} parent=1 // pred_check_branch
      %26 = sbr.rel (0) target = $region13
    $region12: #{tpu_custom_call.1} parent=1 // pred_region
      _
    $region13: #{tpu_custom_call.1} parent=1 // pred_fallthru
      _
    // Predicated region
    $region14: #{tpu_custom_call.1} parent=1 // pred_check
      _
    $region15: #{tpu_custom_call.1} parent=1 // pred_check_branch
      %28 = sbr.rel (0) target = $region17
    $region16: #{tpu_custom_call.1} parent=1 // pred_region
      _
    $region17: #{tpu_custom_call.1} parent=1 // pred_fallthru
      _
    // Predicated region
    $region18: #{tpu_custom_call.1} parent=1 // pred_check
      _
    $region19: #{tpu_custom_call.1} parent=1 // pred_check_branch
      %30 = sbr.rel (0) target = $region21
    $region20: #{tpu_custom_call.1} parent=1 // pred_region
      %s32 = ssub.s32 512, 512
      %33 = vsyncadd [#allocation3], %s32
      %s34 = sshll.u32 [#allocation2], 4
      %s35 = int_to_ptr.vmem [resolvable:$true] %s34
      %40 = dma.hbm_to_vmem [thread:$0]  %s4, 512, %s35, [#allocation3], 64, 64, 4
    $region21: #{tpu_custom_call.1} parent=1 // pred_fallthru
      _
    // Predicated region
    $region22: #{tpu_custom_call.1} parent=1 // pred_check
      _
    $region23: #{tpu_custom_call.1} parent=1 // pred_check_branch
      %42 = sbr.rel (0) target = $region25
    $region24: #{tpu_custom_call.1} parent=1 // pred_region
      %s44 = ssub.s32 512, 512
      %45 = vsyncadd [#allocation6], %s44
      %s46 = sshll.u32 [#allocation5], 4
      %s47 = int_to_ptr.vmem [resolvable:$true] %s46
      %52 = dma.hbm_to_vmem [thread:$0]  %s5, 512, %s47, [#allocation6], 64, 64, 4
    $region25: #{tpu_custom_call.1} parent=1 // pred_fallthru
      _
    // Predicated region
    $region26: #{tpu_custom_call.1} parent=1 // pred_check
      _
    $region27: #{tpu_custom_call.1} parent=1 // pred_check_branch
      %54 = sbr.rel (0) target = $region29
    $region28: #{tpu_custom_call.1} parent=1 // pred_region
      %s56 = ssub.s32 1024, 1024
      %57 = vsyncadd [#allocation6], %s56
      %s58 = sshll.u32 [#allocation7], 4
      %s59 = int_to_ptr.vmem [resolvable:$true] %s58
      %64 = dma.hbm_to_vmem [thread:$0]  %s6, 1024, %s59, [#allocation6], 128, 128, 8
    $region29: #{tpu_custom_call.1} parent=1 // pred_fallthru
      _
    // Predicated region
    $region30: #{tpu_custom_call.1} parent=1 // pred_check
      _
    $region31: #{tpu_custom_call.1} parent=1 // pred_check_branch
      %66 = sbr.rel (0) target = $region33
    $region32: #{tpu_custom_call.1} parent=1 // pred_region
      %s68 = ssub.s32 4096, 4096
      %69 = vsyncadd [#allocation9], %s68
      %s70 = sshll.u32 [#allocation8], 4
      %s71 = int_to_ptr.vmem [resolvable:$true] %s70
      %76 = dma.hbm_to_vmem [thread:$0]  %s7, 4096, %s71, [#allocation9], 256, 256, 16
    $region33: #{tpu_custom_call.1} parent=1 // pred_fallthru
      _
    // Predicated region
    $region34: #{tpu_custom_call.1} parent=1 // pred_check
      _
    $region35: #{tpu_custom_call.1} parent=1 // pred_check_branch
      %78 = sbr.rel (0) target = $region37
    $region36: #{tpu_custom_call.1} parent=1 // pred_region
      _
    $region37: #{tpu_custom_call.1} parent=1 // pred_fallthru
      _
    // Predicated region
    $region38: #{tpu_custom_call.1} parent=1 // pred_check
      _
    $region39: #{tpu_custom_call.1} parent=1 // pred_check_branch
      %80 = sbr.rel (0) target = $region41
    $region40: #{tpu_custom_call.1} parent=1 // pred_region
      _
    $region41: #{tpu_custom_call.1} parent=1 // pred_fallthru
      _
    // Predicated region
    $region42: #{tpu_custom_call.1} parent=1 // pred_check
      _
    $region43: #{tpu_custom_call.1} parent=1 // pred_check_branch
      %82 = sbr.rel (0) target = $region45
    $region44: #{tpu_custom_call.1} parent=1 // pred_region
      _
    $region45: #{tpu_custom_call.1} parent=1 // pred_fallthru
      _
    // Predicated region
    $region46: #{tpu_custom_call.1} parent=1 // pred_check
      _
    $region47: #{tpu_custom_call.1} parent=1 // pred_check_branch
      %84 = sbr.rel (0) target = $region49
    $region48: #{tpu_custom_call.1} parent=1 // pred_region
      _
    $region49: #{tpu_custom_call.1} parent=1 // pred_fallthru
      _
    // Predicated region
    $region50: #{tpu_custom_call.1} parent=1 // pred_check
      _
    $region51: #{tpu_custom_call.1} parent=1 // pred_check_branch
      %86 = sbr.rel (0) target = $region53
    $region52: #{tpu_custom_call.1} parent=1 // pred_region
      %87 = dma.done [#allocation3], 512
    $region53: #{tpu_custom_call.1} parent=1 // pred_fallthru
      _
    // Predicated region
    $region54: #{tpu_custom_call.1} parent=1 // pred_check
      _
    $region55: #{tpu_custom_call.1} parent=1 // pred_check_branch
      %89 = sbr.rel (0) target = $region57
    $region56: #{tpu_custom_call.1} parent=1 // pred_region
      %90 = dma.done [#allocation6], 512
    $region57: #{tpu_custom_call.1} parent=1 // pred_fallthru
      _
    // Predicated region
    $region58: #{tpu_custom_call.1} parent=1 // pred_check
      _
    $region59: #{tpu_custom_call.1} parent=1 // pred_check_branch
      %92 = sbr.rel (0) target = $region61
    $region60: #{tpu_custom_call.1} parent=1 // pred_region
      %93 = dma.done [#allocation6], 1024
    $region61: #{tpu_custom_call.1} parent=1 // pred_fallthru
      _
    // Predicated region
    $region62: #{tpu_custom_call.1} parent=1 // pred_check
      _
    $region63: #{tpu_custom_call.1} parent=1 // pred_check_branch
      %95 = sbr.rel (0) target = $region65
    $region64: #{tpu_custom_call.1} parent=1 // pred_region
      %96 = dma.done [#allocation9], 4096
    $region65: #{tpu_custom_call.1} parent=1 // pred_fallthru
      _
    %v98 = vld [vmem:[%s3] sm:$0xf]
    %v99 = vld [vmem:[%s0] sm:$0xf]
    %v100 = vld [vmem:[%s0 + $0x4] sm:$0xf]
    %v101 = vld [vmem:[%s0 + $0x8] sm:$0xf]
    %v102 = vld [vmem:[%s0 + $0xc] sm:$0xf]
    %v103 = vld [vmem:[%s0 + $0x10] sm:$0xf]
    %v104 = vld [vmem:[%s0 + $0x14] sm:$0xf]
    %v105 = vld [vmem:[%s0 + $0x18] sm:$0xf]
    %v106 = vld [vmem:[%s0 + $0x1c] sm:$0xf]
    %v107 = vld [vmem:[#allocation2] sm:$0xf]
    %v108 = vld [vmem:[#allocation2 + $0x4] sm:$0xf]
    %v109 = vld [vmem:[#allocation2 + $0x8] sm:$0xf]
    %v110 = vld [vmem:[#allocation2 + $0xc] sm:$0xf]
    %v111 = vld [vmem:[#allocation2 + $0x10] sm:$0xf]
    %v112 = vld [vmem:[#allocation2 + $0x14] sm:$0xf]
    %v113 = vld [vmem:[#allocation2 + $0x18] sm:$0xf]
    %v114 = vld [vmem:[#allocation2 + $0x1c] sm:$0xf]
    %v115 = vld [vmem:[%s9] sm:$0x1]
    %v116 = vlaneseq
    %v117 = vshrl.u32 %v116, 7
    %v118 = vsub.s32 0, %v117
    %v119 = vrot.slane %v115, %v118
    %v128 = vunpack.c.l.b16 %v99
    %v129 = vunpack.c.l.b16 %v100
    %v130 = vunpack.c.l.b16 %v101
    %v131 = vunpack.c.l.b16 %v102
    %v132 = vunpack.c.l.b16 %v103
    %v133 = vunpack.c.l.b16 %v104
    %v134 = vunpack.c.l.b16 %v105
    %v135 = vunpack.c.l.b16 %v106
    %v136 = vpack.c.b16 %v129, %v128
    %v137 = vpack.c.b16 %v131, %v130
    %v138 = vpack.c.b16 %v133, %v132
    %v139 = vpack.c.b16 %v135, %v134
    %v148 = vunpack.c.l.b16 %v107
    %v149 = vunpack.c.l.b16 %v108
    %v150 = vunpack.c.l.b16 %v109
    %v151 = vunpack.c.l.b16 %v110
    %v152 = vunpack.c.l.b16 %v111
    %v153 = vunpack.c.l.b16 %v112
    %v154 = vunpack.c.l.b16 %v113
    %v155 = vunpack.c.l.b16 %v114
    %v156 = vpack.c.b16 %v149, %v148
    %v157 = vpack.c.b16 %v151, %v150
    %v158 = vpack.c.b16 %v153, %v152
    %v159 = vpack.c.b16 %v155, %v154
    %vm164 = vcmask 523264
    %v166 = vsel %vm164, %v136, 0
    %v169 = vsel %vm164, %v137, 0
    %v172 = vsel %vm164, %v138, 0
    %v175 = vsel %vm164, %v139, 0
    %177 = vmatprep.subr.bf16.mxu0 0
    %178 = vmatpush1.bf16.msra.mxu0 %v156
    %179 = vmatprep.subr.bf16.mxu0 0
    %180 = vmatpush1.bf16.msra.mxu0 %v157
    %181 = vmatprep.subr.bf16.mxu0 0
    %182 = vmatpush1.bf16.msra.mxu0 %v158
    %183 = vmatprep.subr.bf16.mxu0 0
    %184 = vmatpush1.bf16.msra.mxu0 %v159
    %185 = vmatprep.subr.bf16.mxu0 0
    %186 = vmatpush1.bf16.msra.mxu0 0
    %187 = vmatprep.subr.bf16.mxu0 0
    %188 = vmatpush1.bf16.msra.mxu0 0
    %189 = vmatprep.subr.bf16.mxu0 0
    %190 = vmatpush1.bf16.msra.mxu0 0
    %191 = vmatprep.subr.bf16.mxu0 0
    %192 = vmatpush1.bf16.msra.mxu0 0
    %193 = vmatprep.subr.bf16.mxu0 0
    %194 = vmatpush1.bf16.msra.mxu0 0
    %195 = vmatprep.subr.bf16.mxu0 0
    %196 = vmatpush1.bf16.msra.mxu0 0
    %197 = vmatprep.subr.bf16.mxu0 0
    %198 = vmatpush1.bf16.msra.mxu0 0
    %199 = vmatprep.subr.bf16.mxu0 0
    %200 = vmatpush1.bf16.msra.mxu0 0
    %201 = vmatprep.subr.bf16.mxu0 0
    %202 = vmatpush1.bf16.msra.mxu0 0
    %203 = vmatprep.subr.bf16.mxu0 0
    %204 = vmatpush1.bf16.msra.mxu0 0
    %205 = vmatprep.subr.bf16.mxu0 0
    %206 = vmatpush1.bf16.msra.mxu0 0
    %207 = vmatprep.subr.bf16.mxu0 0
    %208 = vmatpush1.bf16.msra.mxu0 0
    %209 = vmatprep.mubr.bf16.mxu0 0
    %210 = vmatmul.mubr.bf16.gmra.mrb[0].mxu0 %v166
    %v211 = vpop.f32.mrb[0].mxu0
    %v212 = vadd.f32 %v119, %v211
    %v213 = vpop.f32.mrb[0].mxu0
    %v214 = vpop.f32.mrb[0].mxu0
    %v215 = vadd.f32 %v119, %v214
    %v216 = vpop.f32.mrb[0].mxu0
    %217 = vmatprep.mubr.bf16.mxu0 0
    %218 = vmatmul.mubr.bf16.gmra.mrb[0].mxu0 %v169
    %v219 = vpop.f32.mrb[0].mxu0
    %v220 = vadd.f32 %v119, %v219
    %v221 = vpop.f32.mrb[0].mxu0
    %v222 = vpop.f32.mrb[0].mxu0
    %v223 = vadd.f32 %v119, %v222
    %v224 = vpop.f32.mrb[0].mxu0
    %225 = vmatprep.mubr.bf16.mxu0 0
    %226 = vmatmul.mubr.bf16.gmra.mrb[0].mxu0 %v172
    %v227 = vpop.f32.mrb[0].mxu0
    %v228 = vadd.f32 %v119, %v227
    %v229 = vpop.f32.mrb[0].mxu0
    %v230 = vpop.f32.mrb[0].mxu0
    %v231 = vadd.f32 %v119, %v230
    %v232 = vpop.f32.mrb[0].mxu0
    %233 = vmatprep.mubr.bf16.mxu0 0
    %234 = vmatmul.mubr.bf16.gmra.mrb[0].mxu0 %v175
    %v235 = vpop.f32.mrb[0].mxu0
    %v236 = vadd.f32 %v119, %v235
    %v237 = vpop.f32.mrb[0].mxu0
    %v238 = vpop.f32.mrb[0].mxu0
    %v239 = vadd.f32 %v119, %v238
    %v240 = vpop.f32.mrb[0].mxu0
    %241 = vdwg.mxu0
    %v242 = vmax.f32 %v212, 0.0
    %v243 = vmax.f32 %v215, 0.0
    %v244 = vmax.f32 %v220, 0.0
    %v245 = vmax.f32 %v223, 0.0
    %v246 = vmax.f32 %v228, 0.0
    %v247 = vmax.f32 %v231, 0.0
    %v248 = vmax.f32 %v236, 0.0
    %v249 = vmax.f32 %v239, 0.0
    %v250 = vpack.c.bf16 %v243, %v242
    %v251 = vpack.c.bf16 %v245, %v244
    %v252 = vpack.c.bf16 %v247, %v246
    %v253 = vpack.c.bf16 %v249, %v248
    %v254 = vld [vmem:[#allocation7] sm:$0xf]
    %v255 = vld [vmem:[#allocation7 + $0x8] sm:$0xf]
    %v256 = vld [vmem:[#allocation7 + $0x10] sm:$0xf]
    %v257 = vld [vmem:[#allocation7 + $0x18] sm:$0xf]
    %v258 = vld [vmem:[#allocation7 + $0x20] sm:$0xf]
    %v259 = vld [vmem:[#allocation7 + $0x28] sm:$0xf]
    %v260 = vld [vmem:[#allocation7 + $0x30] sm:$0xf]
    %v261 = vld [vmem:[#allocation7 + $0x38] sm:$0xf]
    %v262 = vld [vmem:[%s10] sm:$0x1]
    %v264 = vlaneseq
    %v265 = vshrl.u32 %v264, 7
    %v266 = vsub.s32 0, %v265
    %v267 = vrot.slane %v262, %v266
    %v277 = vunpack.c.l.b16 %v254
    %v278 = vunpack.c.l.b16 %v255
    %v279 = vunpack.c.l.b16 %v256
    %v280 = vunpack.c.l.b16 %v257
    %v281 = vunpack.c.l.b16 %v258
    %v282 = vunpack.c.l.b16 %v259
    %v283 = vunpack.c.l.b16 %v260
    %v284 = vunpack.c.l.b16 %v261
    %v285 = vpack.c.b16 %v278, %v277
    %v286 = vpack.c.b16 %v280, %v279
    %v287 = vpack.c.b16 %v282, %v281
    %v288 = vpack.c.b16 %v284, %v283
    %v294 = vsel %vm164, %v250, 0
    %v297 = vsel %vm164, %v251, 0
    %v300 = vsel %vm164, %v252, 0
    %v303 = vsel %vm164, %v253, 0
    %305 = vmatprep.subr.bf16.mxu0 0
    %306 = vmatpush1.bf16.msra.mxu0 %v285
    %307 = vmatprep.subr.bf16.mxu0 0
    %308 = vmatpush1.bf16.msra.mxu0 %v286
    %309 = vmatprep.subr.bf16.mxu0 0
    %310 = vmatpush1.bf16.msra.mxu0 %v287
    %311 = vmatprep.subr.bf16.mxu0 0
    %312 = vmatpush1.bf16.msra.mxu0 %v288
    %313 = vmatprep.subr.bf16.mxu0 0
    %314 = vmatpush1.bf16.msra.mxu0 0
    %315 = vmatprep.subr.bf16.mxu0 0
    %316 = vmatpush1.bf16.msra.mxu0 0
    %317 = vmatprep.subr.bf16.mxu0 0
    %318 = vmatpush1.bf16.msra.mxu0 0
    %319 = vmatprep.subr.bf16.mxu0 0
    %320 = vmatpush1.bf16.msra.mxu0 0
    %321 = vmatprep.subr.bf16.mxu0 0
    %322 = vmatpush1.bf16.msra.mxu0 0
    %323 = vmatprep.subr.bf16.mxu0 0
    %324 = vmatpush1.bf16.msra.mxu0 0
    %325 = vmatprep.subr.bf16.mxu0 0
    %326 = vmatpush1.bf16.msra.mxu0 0
    %327 = vmatprep.subr.bf16.mxu0 0
    %328 = vmatpush1.bf16.msra.mxu0 0
    %329 = vmatprep.subr.bf16.mxu0 0
    %330 = vmatpush1.bf16.msra.mxu0 0
    %331 = vmatprep.subr.bf16.mxu0 0
    %332 = vmatpush1.bf16.msra.mxu0 0
    %333 = vmatprep.subr.bf16.mxu0 0
    %334 = vmatpush1.bf16.msra.mxu0 0
    %335 = vmatprep.subr.bf16.mxu0 0
    %336 = vmatpush1.bf16.msra.mxu0 0
    %337 = vmatprep.mubr.bf16.mxu0 0
    %338 = vmatmul.mubr.bf16.gmra.mrb[0].mxu0 %v294
    %v339 = vpop.f32.mrb[0].mxu0
    %v340 = vadd.f32 %v267, %v339
    %v341 = vpop.f32.mrb[0].mxu0
    %v342 = vpop.f32.mrb[0].mxu0
    %v343 = vadd.f32 %v267, %v342
    %v344 = vpop.f32.mrb[0].mxu0
    %345 = vmatprep.mubr.bf16.mxu0 0
    %346 = vmatmul.mubr.bf16.gmra.mrb[0].mxu0 %v297
    %v347 = vpop.f32.mrb[0].mxu0
    %v348 = vadd.f32 %v267, %v347
    %v349 = vpop.f32.mrb[0].mxu0
    %v350 = vpop.f32.mrb[0].mxu0
    %v351 = vadd.f32 %v267, %v350
    %v352 = vpop.f32.mrb[0].mxu0
    %353 = vmatprep.mubr.bf16.mxu0 0
    %354 = vmatmul.mubr.bf16.gmra.mrb[0].mxu0 %v300
    %v355 = vpop.f32.mrb[0].mxu0
    %v356 = vadd.f32 %v267, %v355
    %v357 = vpop.f32.mrb[0].mxu0
    %v358 = vpop.f32.mrb[0].mxu0
    %v359 = vadd.f32 %v267, %v358
    %v360 = vpop.f32.mrb[0].mxu0
    %361 = vmatprep.mubr.bf16.mxu0 0
    %362 = vmatmul.mubr.bf16.gmra.mrb[0].mxu0 %v303
    %v363 = vpop.f32.mrb[0].mxu0
    %v364 = vadd.f32 %v267, %v363
    %v365 = vpop.f32.mrb[0].mxu0
    %v366 = vpop.f32.mrb[0].mxu0
    %v367 = vadd.f32 %v267, %v366
    %v368 = vpop.f32.mrb[0].mxu0
    %369 = vdwg.mxu0
    %v370 = vpack.c.bf16 %v343, %v340
    %v371 = vpack.c.bf16 %v351, %v348
    %v372 = vpack.c.bf16 %v359, %v356
    %v373 = vpack.c.bf16 %v367, %v364
    %v374 = vld [vmem:[#allocation8] sm:$0xff]
    %v375 = vld [vmem:[#allocation8 + $0x10] sm:$0xff]
    %v376 = vld [vmem:[#allocation8 + $0x20] sm:$0xff]
    %v377 = vld [vmem:[#allocation8 + $0x30] sm:$0xff]
    %v378 = vld [vmem:[#allocation8 + $0x40] sm:$0xff]
    %v379 = vld [vmem:[#allocation8 + $0x50] sm:$0xff]
    %v380 = vld [vmem:[#allocation8 + $0x60] sm:$0xff]
    %v381 = vld [vmem:[#allocation8 + $0x70] sm:$0xff]
    %v382 = vld [vmem:[#allocation8 + $0x80] sm:$0xff]
    %v383 = vld [vmem:[#allocation8 + $0x90] sm:$0xff]
    %v384 = vld [vmem:[#allocation8 + $0xa0] sm:$0xff]
    %v385 = vld [vmem:[#allocation8 + $0xb0] sm:$0xff]
    %v386 = vld [vmem:[#allocation8 + $0xc0] sm:$0xff]
    %v387 = vld [vmem:[#allocation8 + $0xd0] sm:$0xff]
    %v388 = vld [vmem:[#allocation8 + $0xe0] sm:$0xff]
    %v389 = vld [vmem:[#allocation8 + $0xf0] sm:$0xff]
    %v390 = vld [vmem:[%s11] sm:$0x3]
    %v392 = vlaneseq
    %v393 = vshrl.u32 %v392, 7
    %v394 = vsub.s32 0, %v393
    %v395 = vrot.slane %v390, %v394
    %v396 = vlaneseq
    %v397 = vshrl.u32 %v396, 7
    %v398 = vsub.s32 1, %v397
    %v399 = vrot.slane %v390, %v398
    %v418 = vunpack.c.l.b16 %v374
    %v419 = vunpack.c.h.b16 %v374
    %v420 = vunpack.c.l.b16 %v375
    %v421 = vunpack.c.h.b16 %v375
    %v422 = vunpack.c.l.b16 %v376
    %v423 = vunpack.c.h.b16 %v376
    %v424 = vunpack.c.l.b16 %v377
    %v425 = vunpack.c.h.b16 %v377
    %v426 = vunpack.c.l.b16 %v378
    %v427 = vunpack.c.h.b16 %v378
    %v428 = vunpack.c.l.b16 %v379
    %v429 = vunpack.c.h.b16 %v379
    %v430 = vunpack.c.l.b16 %v380
    %v431 = vunpack.c.h.b16 %v380
    %v432 = vunpack.c.l.b16 %v381
    %v433 = vunpack.c.h.b16 %v381
    %v434 = vunpack.c.l.b16 %v382
    %v435 = vunpack.c.h.b16 %v382
    %v436 = vunpack.c.l.b16 %v383
    %v437 = vunpack.c.h.b16 %v383
    %v438 = vunpack.c.l.b16 %v384
    %v439 = vunpack.c.h.b16 %v384
    %v440 = vunpack.c.l.b16 %v385
    %v441 = vunpack.c.h.b16 %v385
    %v442 = vunpack.c.l.b16 %v386
    %v443 = vunpack.c.h.b16 %v386
    %v444 = vunpack.c.l.b16 %v387
    %v445 = vunpack.c.h.b16 %v387
    %v446 = vunpack.c.l.b16 %v388
    %v447 = vunpack.c.h.b16 %v388
    %v448 = vunpack.c.l.b16 %v389
    %v449 = vunpack.c.h.b16 %v389
    %v450 = vpack.c.b16 %v420, %v418
    %v451 = vpack.c.b16 %v421, %v419
    %v452 = vpack.c.b16 %v424, %v422
    %v453 = vpack.c.b16 %v425, %v423
    %v454 = vpack.c.b16 %v428, %v426
    %v455 = vpack.c.b16 %v429, %v427
    %v456 = vpack.c.b16 %v432, %v430
    %v457 = vpack.c.b16 %v433, %v431
    %v458 = vpack.c.b16 %v436, %v434
    %v459 = vpack.c.b16 %v437, %v435
    %v460 = vpack.c.b16 %v440, %v438
    %v461 = vpack.c.b16 %v441, %v439
    %v462 = vpack.c.b16 %v444, %v442
    %v463 = vpack.c.b16 %v445, %v443
    %v464 = vpack.c.b16 %v448, %v446
    %v465 = vpack.c.b16 %v449, %v447
    %482 = vmatprep.subr.bf16.mxu0 %v451
    %483 = vmatpush1.bf16.msra.mxu0 %v450
    %484 = vmatprep.subr.bf16.mxu0 %v453
    %485 = vmatpush1.bf16.msra.mxu0 %v452
    %486 = vmatprep.subr.bf16.mxu0 %v455
    %487 = vmatpush1.bf16.msra.mxu0 %v454
    %488 = vmatprep.subr.bf16.mxu0 %v457
    %489 = vmatpush1.bf16.msra.mxu0 %v456
    %490 = vmatprep.subr.bf16.mxu0 %v459
    %491 = vmatpush1.bf16.msra.mxu0 %v458
    %492 = vmatprep.subr.bf16.mxu0 %v461
    %493 = vmatpush1.bf16.msra.mxu0 %v460
    %494 = vmatprep.subr.bf16.mxu0 %v463
    %495 = vmatpush1.bf16.msra.mxu0 %v462
    %496 = vmatprep.subr.bf16.mxu0 %v465
    %497 = vmatpush1.bf16.msra.mxu0 %v464
    %498 = vmatprep.subr.bf16.mxu0 0
    %499 = vmatpush1.bf16.msra.mxu0 0
    %500 = vmatprep.subr.bf16.mxu0 0
    %501 = vmatpush1.bf16.msra.mxu0 0
    %502 = vmatprep.subr.bf16.mxu0 0
    %503 = vmatpush1.bf16.msra.mxu0 0
    %504 = vmatprep.subr.bf16.mxu0 0
    %505 = vmatpush1.bf16.msra.mxu0 0
    %506 = vmatprep.subr.bf16.mxu0 0
    %507 = vmatpush1.bf16.msra.mxu0 0
    %508 = vmatprep.subr.bf16.mxu0 0
    %509 = vmatpush1.bf16.msra.mxu0 0
    %510 = vmatprep.subr.bf16.mxu0 0
    %511 = vmatpush1.bf16.msra.mxu0 0
    %512 = vmatprep.subr.bf16.mxu0 0
    %513 = vmatpush1.bf16.msra.mxu0 0
    %514 = vmatprep.mubr.bf16.mxu0 0
    %515 = vmatmul.mubr.bf16.gmra.mrb[0].mxu0 %v370
    %v516 = vpop.f32.mrb[0].mxu0
    %v517 = vadd.f32 %v395, %v516
    %v518 = vpop.f32.mrb[0].mxu0
    %v519 = vadd.f32 %v399, %v518
    %v520 = vpop.f32.mrb[0].mxu0
    %v521 = vadd.f32 %v395, %v520
    %v522 = vpop.f32.mrb[0].mxu0
    %v523 = vadd.f32 %v399, %v522
    %524 = vmatprep.mubr.bf16.mxu0 0
    %525 = vmatmul.mubr.bf16.gmra.mrb[0].mxu0 %v371
    %v526 = vpop.f32.mrb[0].mxu0
    %v527 = vadd.f32 %v395, %v526
    %v528 = vpop.f32.mrb[0].mxu0
    %v529 = vadd.f32 %v399, %v528
    %v530 = vpop.f32.mrb[0].mxu0
    %v531 = vadd.f32 %v395, %v530
    %v532 = vpop.f32.mrb[0].mxu0
    %v533 = vadd.f32 %v399, %v532
    %534 = vmatprep.mubr.bf16.mxu0 0
    %535 = vmatmul.mubr.bf16.gmra.mrb[0].mxu0 %v372
    %v536 = vpop.f32.mrb[0].mxu0
    %v537 = vadd.f32 %v395, %v536
    %v538 = vpop.f32.mrb[0].mxu0
    %v539 = vadd.f32 %v399, %v538
    %v540 = vpop.f32.mrb[0].mxu0
    %v541 = vadd.f32 %v395, %v540
    %v542 = vpop.f32.mrb[0].mxu0
    %v543 = vadd.f32 %v399, %v542
    %544 = vmatprep.mubr.bf16.mxu0 0
    %545 = vmatmul.mubr.bf16.gmra.mrb[0].mxu0 %v373
    %v546 = vpop.f32.mrb[0].mxu0
    %v547 = vadd.f32 %v395, %v546
    %v548 = vpop.f32.mrb[0].mxu0
    %v549 = vadd.f32 %v399, %v548
    %v550 = vpop.f32.mrb[0].mxu0
    %v551 = vadd.f32 %v395, %v550
    %v552 = vpop.f32.mrb[0].mxu0
    %v553 = vadd.f32 %v399, %v552
    %554 = vdwg.mxu0
    %v555 = vtanh.pop %v517
    %v556 = vtanh.pop %v519
    %v557 = vtanh.pop %v521
    %v558 = vtanh.pop %v523
    %v559 = vtanh.pop %v527
    %v560 = vtanh.pop %v529
    %v561 = vtanh.pop %v531
    %v562 = vtanh.pop %v533
    %v563 = vtanh.pop %v537
    %v564 = vtanh.pop %v539
    %v565 = vtanh.pop %v541
    %v566 = vtanh.pop %v543
    %v567 = vtanh.pop %v547
    %v568 = vtanh.pop %v549
    %v569 = vtanh.pop %v551
    %v570 = vtanh.pop %v553
    %v571 = vld [vmem:[#allocation8 + $0x8] sm:$0xff]
    %v572 = vld [vmem:[#allocation8 + $0x18] sm:$0xff]
    %v573 = vld [vmem:[#allocation8 + $0x28] sm:$0xff]
    %v574 = vld [vmem:[#allocation8 + $0x38] sm:$0xff]
    %v575 = vld [vmem:[#allocation8 + $0x48] sm:$0xff]
    %v576 = vld [vmem:[#allocation8 + $0x58] sm:$0xff]
    %v577 = vld [vmem:[#allocation8 + $0x68] sm:$0xff]
    %v578 = vld [vmem:[#allocation8 + $0x78] sm:$0xff]
    %v579 = vld [vmem:[#allocation8 + $0x88] sm:$0xff]
    %v580 = vld [vmem:[#allocation8 + $0x98] sm:$0xff]
    %v581 = vld [vmem:[#allocation8 + $0xa8] sm:$0xff]
    %v582 = vld [vmem:[#allocation8 + $0xb8] sm:$0xff]
    %v583 = vld [vmem:[#allocation8 + $0xc8] sm:$0xff]
    %v584 = vld [vmem:[#allocation8 + $0xd8] sm:$0xff]
    %v585 = vld [vmem:[#allocation8 + $0xe8] sm:$0xff]
    %v586 = vld [vmem:[#allocation8 + $0xf8] sm:$0xff]
    %v587 = vld [vmem:[%s11 + $0x2] sm:$0x3]
    %v589 = vlaneseq
    %v590 = vshrl.u32 %v589, 7
    %v591 = vsub.s32 0, %v590
    %v592 = vrot.slane %v587, %v591
    %v593 = vlaneseq
    %v594 = vshrl.u32 %v593, 7
    %v595 = vsub.s32 1, %v594
    %v596 = vrot.slane %v587, %v595
    %v615 = vunpack.c.l.b16 %v571
    %v616 = vunpack.c.h.b16 %v571
    %v617 = vunpack.c.l.b16 %v572
    %v618 = vunpack.c.h.b16 %v572
    %v619 = vunpack.c.l.b16 %v573
    %v620 = vunpack.c.h.b16 %v573
    %v621 = vunpack.c.l.b16 %v574
    %v622 = vunpack.c.h.b16 %v574
    %v623 = vunpack.c.l.b16 %v575
    %v624 = vunpack.c.h.b16 %v575
    %v625 = vunpack.c.l.b16 %v576
    %v626 = vunpack.c.h.b16 %v576
    %v627 = vunpack.c.l.b16 %v577
    %v628 = vunpack.c.h.b16 %v577
    %v629 = vunpack.c.l.b16 %v578
    %v630 = vunpack.c.h.b16 %v578
    %v631 = vunpack.c.l.b16 %v579
    %v632 = vunpack.c.h.b16 %v579
    %v633 = vunpack.c.l.b16 %v580
    %v634 = vunpack.c.h.b16 %v580
    %v635 = vunpack.c.l.b16 %v581
    %v636 = vunpack.c.h.b16 %v581
    %v637 = vunpack.c.l.b16 %v582
    %v638 = vunpack.c.h.b16 %v582
    %v639 = vunpack.c.l.b16 %v583
    %v640 = vunpack.c.h.b16 %v583
    %v641 = vunpack.c.l.b16 %v584
    %v642 = vunpack.c.h.b16 %v584
    %v643 = vunpack.c.l.b16 %v585
    %v644 = vunpack.c.h.b16 %v585
    %v645 = vunpack.c.l.b16 %v586
    %v646 = vunpack.c.h.b16 %v586
    %v647 = vpack.c.b16 %v617, %v615
    %v648 = vpack.c.b16 %v618, %v616
    %v649 = vpack.c.b16 %v621, %v619
    %v650 = vpack.c.b16 %v622, %v620
    %v651 = vpack.c.b16 %v625, %v623
    %v652 = vpack.c.b16 %v626, %v624
    %v653 = vpack.c.b16 %v629, %v627
    %v654 = vpack.c.b16 %v630, %v628
    %v655 = vpack.c.b16 %v633, %v631
    %v656 = vpack.c.b16 %v634, %v632
    %v657 = vpack.c.b16 %v637, %v635
    %v658 = vpack.c.b16 %v638, %v636
    %v659 = vpack.c.b16 %v641, %v639
    %v660 = vpack.c.b16 %v642, %v640
    %v661 = vpack.c.b16 %v645, %v643
    %v662 = vpack.c.b16 %v646, %v644
    %679 = vmatprep.subr.bf16.mxu0 %v648
    %680 = vmatpush1.bf16.msra.mxu0 %v647
    %681 = vmatprep.subr.bf16.mxu0 %v650
    %682 = vmatpush1.bf16.msra.mxu0 %v649
    %683 = vmatprep.subr.bf16.mxu0 %v652
    %684 = vmatpush1.bf16.msra.mxu0 %v651
    %685 = vmatprep.subr.bf16.mxu0 %v654
    %686 = vmatpush1.bf16.msra.mxu0 %v653
    %687 = vmatprep.subr.bf16.mxu0 %v656
    %688 = vmatpush1.bf16.msra.mxu0 %v655
    %689 = vmatprep.subr.bf16.mxu0 %v658
    %690 = vmatpush1.bf16.msra.mxu0 %v657
    %691 = vmatprep.subr.bf16.mxu0 %v660
    %692 = vmatpush1.bf16.msra.mxu0 %v659
    %693 = vmatprep.subr.bf16.mxu0 %v662
    %694 = vmatpush1.bf16.msra.mxu0 %v661
    %695 = vmatprep.subr.bf16.mxu0 0
    %696 = vmatpush1.bf16.msra.mxu0 0
    %697 = vmatprep.subr.bf16.mxu0 0
    %698 = vmatpush1.bf16.msra.mxu0 0
    %699 = vmatprep.subr.bf16.mxu0 0
    %700 = vmatpush1.bf16.msra.mxu0 0
    %701 = vmatprep.subr.bf16.mxu0 0
    %702 = vmatpush1.bf16.msra.mxu0 0
    %703 = vmatprep.subr.bf16.mxu0 0
    %704 = vmatpush1.bf16.msra.mxu0 0
    %705 = vmatprep.subr.bf16.mxu0 0
    %706 = vmatpush1.bf16.msra.mxu0 0
    %707 = vmatprep.subr.bf16.mxu0 0
    %708 = vmatpush1.bf16.msra.mxu0 0
    %709 = vmatprep.subr.bf16.mxu0 0
    %710 = vmatpush1.bf16.msra.mxu0 0
    %711 = vmatprep.mubr.bf16.mxu0 0
    %712 = vmatmul.mubr.bf16.gmra.mrb[0].mxu0 %v370
    %v713 = vpop.f32.mrb[0].mxu0
    %v714 = vadd.f32 %v592, %v713
    %v715 = vpop.f32.mrb[0].mxu0
    %v716 = vadd.f32 %v596, %v715
    %v717 = vpop.f32.mrb[0].mxu0
    %v718 = vadd.f32 %v592, %v717
    %v719 = vpop.f32.mrb[0].mxu0
    %v720 = vadd.f32 %v596, %v719
    %721 = vmatprep.mubr.bf16.mxu0 0
    %722 = vmatmul.mubr.bf16.gmra.mrb[0].mxu0 %v371
    %v723 = vpop.f32.mrb[0].mxu0
    %v724 = vadd.f32 %v592, %v723
    %v725 = vpop.f32.mrb[0].mxu0
    %v726 = vadd.f32 %v596, %v725
    %v727 = vpop.f32.mrb[0].mxu0
    %v728 = vadd.f32 %v592, %v727
    %v729 = vpop.f32.mrb[0].mxu0
    %v730 = vadd.f32 %v596, %v729
    %731 = vmatprep.mubr.bf16.mxu0 0
    %732 = vmatmul.mubr.bf16.gmra.mrb[0].mxu0 %v372
    %v733 = vpop.f32.mrb[0].mxu0
    %v734 = vadd.f32 %v592, %v733
    %v735 = vpop.f32.mrb[0].mxu0
    %v736 = vadd.f32 %v596, %v735
    %v737 = vpop.f32.mrb[0].mxu0
    %v738 = vadd.f32 %v592, %v737
    %v739 = vpop.f32.mrb[0].mxu0
    %v740 = vadd.f32 %v596, %v739
    %741 = vmatprep.mubr.bf16.mxu0 0
    %742 = vmatmul.mubr.bf16.gmra.mrb[0].mxu0 %v373
    %v743 = vpop.f32.mrb[0].mxu0
    %v744 = vadd.f32 %v592, %v743
    %v745 = vpop.f32.mrb[0].mxu0
    %v746 = vadd.f32 %v596, %v745
    %v747 = vpop.f32.mrb[0].mxu0
    %v748 = vadd.f32 %v592, %v747
    %v749 = vpop.f32.mrb[0].mxu0
    %v750 = vadd.f32 %v596, %v749
    %751 = vdwg.mxu0
    %v752 = vxor.u32 %v714, 2147483648
    %v753 = vxor.u32 %v716, 2147483648
    %v754 = vxor.u32 %v718, 2147483648
    %v755 = vxor.u32 %v720, 2147483648
    %v756 = vxor.u32 %v724, 2147483648
    %v757 = vxor.u32 %v726, 2147483648
    %v758 = vxor.u32 %v728, 2147483648
    %v759 = vxor.u32 %v730, 2147483648
    %v760 = vxor.u32 %v734, 2147483648
    %v761 = vxor.u32 %v736, 2147483648
    %v762 = vxor.u32 %v738, 2147483648
    %v763 = vxor.u32 %v740, 2147483648
    %v764 = vxor.u32 %v744, 2147483648
    %v765 = vxor.u32 %v746, 2147483648
    %v766 = vxor.u32 %v748, 2147483648
    %v767 = vxor.u32 %v750, 2147483648
    %v768 = vmul.f32 %v752, 1.442695
    %v769 = vpow.pop %v768
    %v770 = vmul.f32 %v753, 1.442695
    %v771 = vpow.pop %v770
    %v772 = vmul.f32 %v754, 1.442695
    %v773 = vpow.pop %v772
    %v774 = vmul.f32 %v755, 1.442695
    %v775 = vpow.pop %v774
    %v776 = vmul.f32 %v756, 1.442695
    %v777 = vpow.pop %v776
    %v778 = vmul.f32 %v757, 1.442695
    %v779 = vpow.pop %v778
    %v780 = vmul.f32 %v758, 1.442695
    %v781 = vpow.pop %v780
    %v782 = vmul.f32 %v759, 1.442695
    %v783 = vpow.pop %v782
    %v784 = vmul.f32 %v760, 1.442695
    %v785 = vpow.pop %v784
    %v786 = vmul.f32 %v761, 1.442695
    %v787 = vpow.pop %v786
    %v788 = vmul.f32 %v762, 1.442695
    %v789 = vpow.pop %v788
    %v790 = vmul.f32 %v763, 1.442695
    %v791 = vpow.pop %v790
    %v792 = vmul.f32 %v764, 1.442695
    %v793 = vpow.pop %v792
    %v794 = vmul.f32 %v765, 1.442695
    %v795 = vpow.pop %v794
    %v796 = vmul.f32 %v766, 1.442695
    %v797 = vpow.pop %v796
    %v798 = vmul.f32 %v767, 1.442695
    %v799 = vpow.pop %v798
    %v800 = vadd.f32 %v769, 1.0
    %v801 = vadd.f32 %v771, 1.0
    %v802 = vadd.f32 %v773, 1.0
    %v803 = vadd.f32 %v775, 1.0
    %v804 = vadd.f32 %v777, 1.0
    %v805 = vadd.f32 %v779, 1.0
    %v806 = vadd.f32 %v781, 1.0
    %v807 = vadd.f32 %v783, 1.0
    %v808 = vadd.f32 %v785, 1.0
    %v809 = vadd.f32 %v787, 1.0
    %v810 = vadd.f32 %v789, 1.0
    %v811 = vadd.f32 %v791, 1.0
    %v812 = vadd.f32 %v793, 1.0
    %v813 = vadd.f32 %v795, 1.0
    %v814 = vadd.f32 %v797, 1.0
    %v815 = vadd.f32 %v799, 1.0
    %v816 = vrcp.pop %v800
    %v817 = vmul.f32 1.0, %v816
    %v818 = vrcp.pop %v801
    %v819 = vmul.f32 1.0, %v818
    %v820 = vrcp.pop %v802
    %v821 = vmul.f32 1.0, %v820
    %v822 = vrcp.pop %v803
    %v823 = vmul.f32 1.0, %v822
    %v824 = vrcp.pop %v804
    %v825 = vmul.f32 1.0, %v824
    %v826 = vrcp.pop %v805
    %v827 = vmul.f32 1.0, %v826
    %v828 = vrcp.pop %v806
    %v829 = vmul.f32 1.0, %v828
    %v830 = vrcp.pop %v807
    %v831 = vmul.f32 1.0, %v830
    %v832 = vrcp.pop %v808
    %v833 = vmul.f32 1.0, %v832
    %v834 = vrcp.pop %v809
    %v835 = vmul.f32 1.0, %v834
    %v836 = vrcp.pop %v810
    %v837 = vmul.f32 1.0, %v836
    %v838 = vrcp.pop %v811
    %v839 = vmul.f32 1.0, %v838
    %v840 = vrcp.pop %v812
    %v841 = vmul.f32 1.0, %v840
    %v842 = vrcp.pop %v813
    %v843 = vmul.f32 1.0, %v842
    %v844 = vrcp.pop %v814
    %v845 = vmul.f32 1.0, %v844
    %v846 = vrcp.pop %v815
    %v847 = vmul.f32 1.0, %v846
    %v848 = vmul.f32 %v555, %v817
    %v849 = vmul.f32 %v556, %v819
    %v850 = vmul.f32 %v557, %v821
    %v851 = vmul.f32 %v558, %v823
    %v852 = vmul.f32 %v559, %v825
    %v853 = vmul.f32 %v560, %v827
    %v854 = vmul.f32 %v561, %v829
    %v855 = vmul.f32 %v562, %v831
    %v856 = vmul.f32 %v563, %v833
    %v857 = vmul.f32 %v564, %v835
    %v858 = vmul.f32 %v565, %v837
    %v859 = vmul.f32 %v566, %v839
    %v860 = vmul.f32 %v567, %v841
    %v861 = vmul.f32 %v568, %v843
    %v862 = vmul.f32 %v569, %v845
    %v863 = vmul.f32 %v570, %v847
    %v864 = vpack.c.bf16 %v850, %v848
    %v865 = vpack.c.bf16 %v851, %v849
    %v866 = vpack.c.bf16 %v854, %v852
    %v867 = vpack.c.bf16 %v855, %v853
    %v868 = vpack.c.bf16 %v858, %v856
    %v869 = vpack.c.bf16 %v859, %v857
    %v870 = vpack.c.bf16 %v862, %v860
    %v871 = vpack.c.bf16 %v863, %v861
    %v872 = vld [vmem:[%s8] sm:$0x3]
    %v875 = vunpack.c.l.s4 1966171168
    %v876 = vunpack.c.0.s8 %v875
    %v877 = vlaneseq
    %v878 = vshrl.u32 %v877, 7
    %v879 = vsub.s32 %v876, %v878
    %v880 = vrot.slane %v872, %v879
    %v881 = vcombine.high %v880, %v880
    %v883 = vunpack.c.l.s4 1966171168
    %v884 = vunpack.c.0.s8 %v883
    %v885 = vlaneseq
    %v886 = vshrl.u32 %v885, 7
    %v887 = vsub.s32 %v884, %v886
    %v888 = vrot.slane %v880, %v887
    %v890 = vunpack.c.l.s4 1966171168
    %v891 = vunpack.c.0.s8 %v890
    %v892 = vlaneseq
    %v893 = vshrl.u32 %v892, 7
    %v894 = vsub.s32 %v891, %v893
    %v895 = vrot.slane %v881, %v894
    %898 = vmatprep.subr.bf16.mxu0 %v865
    %899 = vmatpush1.bf16.xpose.msra.mxu0 %v864
    %900 = vmatprep.subr.bf16.mxu0 %v867
    %901 = vmatpush1.bf16.xpose.msra.mxu0 %v866
    %902 = vmatprep.subr.bf16.mxu0 %v869
    %903 = vmatpush1.bf16.xpose.msra.mxu0 %v868
    %904 = vmatprep.subr.bf16.mxu0 %v871
    %905 = vmatpush1.bf16.xpose.msra.mxu0 %v870
    %906 = vmatprep.subr.bf16.mxu0 0
    %907 = vmatpush1.bf16.xpose.msra.mxu0 0
    %908 = vmatprep.subr.bf16.mxu0 0
    %909 = vmatpush1.bf16.xpose.msra.mxu0 0
    %910 = vmatprep.subr.bf16.mxu0 0
    %911 = vmatpush1.bf16.xpose.msra.mxu0 0
    %912 = vmatprep.subr.bf16.mxu0 0
    %913 = vmatpush1.bf16.xpose.msra.mxu0 0
    %914 = vmatprep.subr.bf16.mxu0 0
    %915 = vmatpush1.bf16.xpose.msra.mxu0 0
    %916 = vmatprep.subr.bf16.mxu0 0
    %917 = vmatpush1.bf16.xpose.msra.mxu0 0
    %918 = vmatprep.subr.bf16.mxu0 0
    %919 = vmatpush1.bf16.xpose.msra.mxu0 0
    %920 = vmatprep.subr.bf16.mxu0 0
    %921 = vmatpush1.bf16.xpose.msra.mxu0 0
    %922 = vmatprep.subr.bf16.mxu0 0
    %923 = vmatpush1.bf16.xpose.msra.mxu0 0
    %924 = vmatprep.subr.bf16.mxu0 0
    %925 = vmatpush1.bf16.xpose.msra.mxu0 0
    %926 = vmatprep.subr.bf16.mxu0 0
    %927 = vmatpush1.bf16.xpose.msra.mxu0 0
    %928 = vmatprep.subr.bf16.mxu0 0
    %929 = vmatpush1.bf16.xpose.msra.mxu0 0
    %930 = vmatprep.mubr.bf16.mxu0 %v895
    %931 = vmatmul.mubr.bf16.gmra.mrb[0].mxu0 %v888
    %v932 = vpop.f32.mrb[0].mxu0
    %v933 = vadd.f32 0.0, %v932
    %v934 = vpop.f32.mrb[0].mxu0
    %v935 = vpop.f32.mrb[0].mxu0
    %v936 = vpop.f32.mrb[0].mxu0
    %937 = vdwg.mxu0
    %vm938 = vcmp.gt.f32.partialorder %v98, 0.0
    %v939 = vlaneseq
    %v940 = vshrl.u32 %v939, 7
    %v941 = vsub.s32 0, %v940
    %v942 = vrot.slane %v933, %v941
    %v943 = vsel %vm938, %v942, -1e+30
    %vm944 = vcmask 519168
    %v945 = vsel %vm944, %v943, -inf
    %946 = vmax.xlane.f32.xlu0 %v945
    %v947 = vpop.xlane.xlu0 %946
    %v948 = vsub.f32 %v943, %v947
    %v949 = vmul.f32 %v948, 1.442695
    %v950 = vpow.pop %v949
    %v951 = vsel %vm938, %v950, 0.0
    %v952 = vsel %vm944, %v951, 0.0
    %953 = vadd.xlane.f32.xlu0 %v952
    %v954 = vpop.xlane.xlu0 %953
    %vm955 = vcmp.gt.f32.partialorder %v954, 0.0
    %v956 = vrcp.pop %v954
    %v957 = vsel %vm955, %v956, 0.0
    %v958 = vmul.f32 %v951, %v957
    %v959 = vpack.c.bf16 %v958, %v958
    %v960 = vld [vmem:[#allocation5] sm:$0xf]
    %v961 = vld [vmem:[#allocation5 + $0x4] sm:$0xf]
    %v962 = vld [vmem:[#allocation5 + $0x8] sm:$0xf]
    %v963 = vld [vmem:[#allocation5 + $0xc] sm:$0xf]
    %v964 = vld [vmem:[#allocation5 + $0x10] sm:$0xf]
    %v965 = vld [vmem:[#allocation5 + $0x14] sm:$0xf]
    %v966 = vld [vmem:[#allocation5 + $0x18] sm:$0xf]
    %v967 = vld [vmem:[#allocation5 + $0x1c] sm:$0xf]
    %v976 = vunpack.c.l.b16 %v960
    %v977 = vunpack.c.l.b16 %v961
    %v978 = vunpack.c.l.b16 %v962
    %v979 = vunpack.c.l.b16 %v963
    %v980 = vunpack.c.l.b16 %v964
    %v981 = vunpack.c.l.b16 %v965
    %v982 = vunpack.c.l.b16 %v966
    %v983 = vunpack.c.l.b16 %v967
    %v984 = vpack.c.b16 %v977, %v976
    %v985 = vpack.c.b16 %v979, %v978
    %v986 = vpack.c.b16 %v981, %v980
    %v987 = vpack.c.b16 %v983, %v982
    %992 = vmatprep.subr.bf16.mxu0 0
    %993 = vmatpush1.bf16.msra.mxu0 %v984
    %994 = vmatprep.subr.bf16.mxu0 0
    %995 = vmatpush1.bf16.msra.mxu0 %v985
    %996 = vmatprep.subr.bf16.mxu0 0
    %997 = vmatpush1.bf16.msra.mxu0 %v986
    %998 = vmatprep.subr.bf16.mxu0 0
    %999 = vmatpush1.bf16.msra.mxu0 %v987
    %1000 = vmatprep.subr.bf16.mxu0 0
    %1001 = vmatpush1.bf16.msra.mxu0 0
    %1002 = vmatprep.subr.bf16.mxu0 0
    %1003 = vmatpush1.bf16.msra.mxu0 0
    %1004 = vmatprep.subr.bf16.mxu0 0
    %1005 = vmatpush1.bf16.msra.mxu0 0
    %1006 = vmatprep.subr.bf16.mxu0 0
    %1007 = vmatpush1.bf16.msra.mxu0 0
    %1008 = vmatprep.subr.bf16.mxu0 0
    %1009 = vmatpush1.bf16.msra.mxu0 0
    %1010 = vmatprep.subr.bf16.mxu0 0
    %1011 = vmatpush1.bf16.msra.mxu0 0
    %1012 = vmatprep.subr.bf16.mxu0 0
    %1013 = vmatpush1.bf16.msra.mxu0 0
    %1014 = vmatprep.subr.bf16.mxu0 0
    %1015 = vmatpush1.bf16.msra.mxu0 0
    %1016 = vmatprep.subr.bf16.mxu0 0
    %1017 = vmatpush1.bf16.msra.mxu0 0
    %1018 = vmatprep.subr.bf16.mxu0 0
    %1019 = vmatpush1.bf16.msra.mxu0 0
    %1020 = vmatprep.subr.bf16.mxu0 0
    %1021 = vmatpush1.bf16.msra.mxu0 0
    %1022 = vmatprep.subr.bf16.mxu0 0
    %1023 = vmatpush1.bf16.msra.mxu0 0
    %1024 = vmatprep.mubr.bf16.mxu0 0
    %1025 = vmatmul.mubr.bf16.gmra.mrb[0].mxu0 %v294
    %v1026 = vpop.f32.mrb[0].mxu0
    %v1027 = vadd.f32 0.0, %v1026
    %v1028 = vpop.f32.mrb[0].mxu0
    %v1029 = vpop.f32.mrb[0].mxu0
    %v1030 = vadd.f32 0.0, %v1029
    %v1031 = vpop.f32.mrb[0].mxu0
    %1032 = vmatprep.mubr.bf16.mxu0 0
    %1033 = vmatmul.mubr.bf16.gmra.mrb[0].mxu0 %v297
    %v1034 = vpop.f32.mrb[0].mxu0
    %v1035 = vadd.f32 0.0, %v1034
    %v1036 = vpop.f32.mrb[0].mxu0
    %v1037 = vpop.f32.mrb[0].mxu0
    %v1038 = vadd.f32 0.0, %v1037
    %v1039 = vpop.f32.mrb[0].mxu0
    %1040 = vmatprep.mubr.bf16.mxu0 0
    %1041 = vmatmul.mubr.bf16.gmra.mrb[0].mxu0 %v300
    %v1042 = vpop.f32.mrb[0].mxu0
    %v1043 = vadd.f32 0.0, %v1042
    %v1044 = vpop.f32.mrb[0].mxu0
    %v1045 = vpop.f32.mrb[0].mxu0
    %v1046 = vadd.f32 0.0, %v1045
    %v1047 = vpop.f32.mrb[0].mxu0
    %1048 = vmatprep.mubr.bf16.mxu0 0
    %1049 = vmatmul.mubr.bf16.gmra.mrb[0].mxu0 %v303
    %v1050 = vpop.f32.mrb[0].mxu0
    %v1051 = vadd.f32 0.0, %v1050
    %v1052 = vpop.f32.mrb[0].mxu0
    %v1053 = vpop.f32.mrb[0].mxu0
    %v1054 = vadd.f32 0.0, %v1053
    %v1055 = vpop.f32.mrb[0].mxu0
    %1056 = vdwg.mxu0
    %v1057 = vld [vmem:[%s1] sm:$0xf]
    %v1058 = vld [vmem:[%s1 + $0x4] sm:$0xf]
    %v1059 = vld [vmem:[%s1 + $0x8] sm:$0xf]
    %v1060 = vld [vmem:[%s1 + $0xc] sm:$0xf]
    %v1061 = vld [vmem:[%s1 + $0x10] sm:$0xf]
    %v1062 = vld [vmem:[%s1 + $0x14] sm:$0xf]
    %v1063 = vld [vmem:[%s1 + $0x18] sm:$0xf]
    %v1064 = vld [vmem:[%s1 + $0x1c] sm:$0xf]
    %v1065 = vunpack.c.l.bf16 %v1057
    %v1066 = vunpack.c.l.bf16 %v1058
    %v1067 = vunpack.c.l.bf16 %v1059
    %v1068 = vunpack.c.l.bf16 %v1060
    %v1069 = vunpack.c.l.bf16 %v1061
    %v1070 = vunpack.c.l.bf16 %v1062
    %v1071 = vunpack.c.l.bf16 %v1063
    %v1072 = vunpack.c.l.bf16 %v1064
    %vm1073 = vcmask 130048
    %v1074 = vsel %vm1073, %v1065, 0.0
    %1075 = vadd.xlane.f32.xlu0 %v1074
    %v1076 = vpop.xlane.xlu0 %1075
    %v1077 = vsel %vm1073, %v1066, 0.0
    %1078 = vadd.xlane.f32.xlu0 %v1077
    %v1079 = vpop.xlane.xlu0 %1078
    %v1080 = vsel %vm1073, %v1067, 0.0
    %1081 = vadd.xlane.f32.xlu0 %v1080
    %v1082 = vpop.xlane.xlu0 %1081
    %v1083 = vsel %vm1073, %v1068, 0.0
    %1084 = vadd.xlane.f32.xlu0 %v1083
    %v1085 = vpop.xlane.xlu0 %1084
    %v1086 = vsel %vm1073, %v1069, 0.0
    %1087 = vadd.xlane.f32.xlu0 %v1086
    %v1088 = vpop.xlane.xlu0 %1087
    %v1089 = vsel %vm1073, %v1070, 0.0
    %1090 = vadd.xlane.f32.xlu0 %v1089
    %v1091 = vpop.xlane.xlu0 %1090
    %v1092 = vsel %vm1073, %v1071, 0.0
    %1093 = vadd.xlane.f32.xlu0 %v1092
    %v1094 = vpop.xlane.xlu0 %1093
    %v1095 = vsel %vm1073, %v1072, 0.0
    %1096 = vadd.xlane.f32.xlu0 %v1095
    %v1097 = vpop.xlane.xlu0 %1096
    %v1098 = vld [vmem:[%s2] sm:$0xf]
    %v1099 = vld [vmem:[%s2 + $0x4] sm:$0xf]
    %v1100 = vunpack.c.l.bf16 %v1098
    %v1101 = vunpack.c.l.bf16 %v1099
    %v1102 = vsel %vm164, %v1100, 0.0
    %1103 = vadd.xlane.f32.xlu0 %v1102
    %v1104 = vpop.xlane.xlu0 %1103
    %v1105 = vsel %vm164, %v1101, 0.0
    %1106 = vadd.xlane.f32.xlu0 %v1105
    %v1107 = vpop.xlane.xlu0 %1106
    %vm1108 = vcmp.gt.f32.partialorder %v1076, 0.0
    %vm1109 = vcmp.gt.f32.partialorder %v1079, 0.0
    %vm1110 = vcmp.gt.f32.partialorder %v1082, 0.0
    %vm1111 = vcmp.gt.f32.partialorder %v1085, 0.0
    %vm1112 = vcmp.gt.f32.partialorder %v1088, 0.0
    %vm1113 = vcmp.gt.f32.partialorder %v1091, 0.0
    %vm1114 = vcmp.gt.f32.partialorder %v1094, 0.0
    %vm1115 = vcmp.gt.f32.partialorder %v1097, 0.0
    %v1116 = vrcp.pop %v1076
    %v1117 = vrcp.pop %v1079
    %v1118 = vrcp.pop %v1082
    %v1119 = vrcp.pop %v1085
    %v1120 = vrcp.pop %v1088
    %v1121 = vrcp.pop %v1091
    %v1122 = vrcp.pop %v1094
    %v1123 = vrcp.pop %v1097
    %v1124 = vsel %vm1108, %v1116, 0.0
    %v1125 = vsel %vm1109, %v1117, 0.0
    %v1126 = vsel %vm1110, %v1118, 0.0
    %v1127 = vsel %vm1111, %v1119, 0.0
    %v1128 = vsel %vm1112, %v1120, 0.0
    %v1129 = vsel %vm1113, %v1121, 0.0
    %v1130 = vsel %vm1114, %v1122, 0.0
    %v1131 = vsel %vm1115, %v1123, 0.0
    %vm1132 = vcmp.gt.f32.partialorder %v1104, 0.0
    %vm1133 = vcmp.gt.f32.partialorder %v1107, 0.0
    %v1134 = vrcp.pop %v1104
    %v1135 = vrcp.pop %v1107
    %v1136 = vsel %vm1132, %v1134, 0.0
    %v1137 = vsel %vm1133, %v1135, 0.0
    %v1138 = vpack.c.bf16 %v1030, %v1027
    %v1139 = vpack.c.bf16 %v1038, %v1035
    %v1140 = vpack.c.bf16 %v1046, %v1043
    %v1141 = vpack.c.bf16 %v1054, %v1051
    %v1144 = vunpack.c.l.b16 %v1098
    %v1145 = vunpack.c.l.b16 %v1099
    %v1146 = vpack.c.b16 %v1145, %v1144
    %v1148 = vsel %vm164, %v1146, 0
    %1150 = vmatprep.subr.bf16.mxu0 0
    %1151 = vmatpush1.bf16.msra.mxu0 %v1138
    %1152 = vmatprep.subr.bf16.mxu0 0
    %1153 = vmatpush1.bf16.msra.mxu0 %v1139
    %1154 = vmatprep.subr.bf16.mxu0 0
    %1155 = vmatpush1.bf16.msra.mxu0 %v1140
    %1156 = vmatprep.subr.bf16.mxu0 0
    %1157 = vmatpush1.bf16.msra.mxu0 %v1141
    %1158 = vmatprep.subr.bf16.mxu0 0
    %1159 = vmatpush1.bf16.msra.mxu0 0
    %1160 = vmatprep.subr.bf16.mxu0 0
    %1161 = vmatpush1.bf16.msra.mxu0 0
    %1162 = vmatprep.subr.bf16.mxu0 0
    %1163 = vmatpush1.bf16.msra.mxu0 0
    %1164 = vmatprep.subr.bf16.mxu0 0
    %1165 = vmatpush1.bf16.msra.mxu0 0
    %1166 = vmatprep.subr.bf16.mxu0 0
    %1167 = vmatpush1.bf16.msra.mxu0 0
    %1168 = vmatprep.subr.bf16.mxu0 0
    %1169 = vmatpush1.bf16.msra.mxu0 0
    %1170 = vmatprep.subr.bf16.mxu0 0
    %1171 = vmatpush1.bf16.msra.mxu0 0
    %1172 = vmatprep.subr.bf16.mxu0 0
    %1173 = vmatpush1.bf16.msra.mxu0 0
    %1174 = vmatprep.subr.bf16.mxu0 0
    %1175 = vmatpush1.bf16.msra.mxu0 0
    %1176 = vmatprep.subr.bf16.mxu0 0
    %1177 = vmatpush1.bf16.msra.mxu0 0
    %1178 = vmatprep.subr.bf16.mxu0 0
    %1179 = vmatpush1.bf16.msra.mxu0 0
    %1180 = vmatprep.subr.bf16.mxu0 0
    %1181 = vmatpush1.bf16.msra.mxu0 0
    %1182 = vmatprep.mubr.bf16.mxu0 0
    %1183 = vmatmul.mubr.bf16.gmra.mrb[0].mxu0 %v1148
    %v1184 = vpop.f32.mrb[0].mxu0
    %v1185 = vadd.f32 0.0, %v1184
    %v1186 = vpop.f32.mrb[0].mxu0
    %v1187 = vpop.f32.mrb[0].mxu0
    %v1188 = vadd.f32 0.0, %v1187
    %v1189 = vpop.f32.mrb[0].mxu0
    %1190 = vdwg.mxu0
    %v1191 = vmul.f32 %v1185, %v1136
    %v1192 = vmul.f32 %v1188, %v1137
    %v1193 = vpack.c.bf16 %v1192, %v1191
    %v1202 = vunpack.c.l.b16 %v1057
    %v1203 = vunpack.c.l.b16 %v1058
    %v1204 = vunpack.c.l.b16 %v1059
    %v1205 = vunpack.c.l.b16 %v1060
    %v1206 = vunpack.c.l.b16 %v1061
    %v1207 = vunpack.c.l.b16 %v1062
    %v1208 = vunpack.c.l.b16 %v1063
    %v1209 = vunpack.c.l.b16 %v1064
    %v1210 = vpack.c.b16 %v1203, %v1202
    %v1211 = vpack.c.b16 %v1205, %v1204
    %v1212 = vpack.c.b16 %v1207, %v1206
    %v1213 = vpack.c.b16 %v1209, %v1208
    %v1215 = vsel %vm1073, %v1210, 0
    %v1218 = vsel %vm1073, %v1211, 0
    %v1221 = vsel %vm1073, %v1212, 0
    %v1224 = vsel %vm1073, %v1213, 0
    %1226 = vmatprep.subr.bf16.mxu0 0
    %1227 = vmatpush1.bf16.msra.mxu0 %v1193
    %1228 = vmatprep.subr.bf16.mxu0 0
    %1229 = vmatpush1.bf16.msra.mxu0 0
    %1230 = vmatprep.subr.bf16.mxu0 0
    %1231 = vmatpush1.bf16.msra.mxu0 0
    %1232 = vmatprep.subr.bf16.mxu0 0
    %1233 = vmatpush1.bf16.msra.mxu0 0
    %1234 = vmatprep.subr.bf16.mxu0 0
    %1235 = vmatpush1.bf16.msra.mxu0 0
    %1236 = vmatprep.subr.bf16.mxu0 0
    %1237 = vmatpush1.bf16.msra.mxu0 0
    %1238 = vmatprep.subr.bf16.mxu0 0
    %1239 = vmatpush1.bf16.msra.mxu0 0
    %1240 = vmatprep.subr.bf16.mxu0 0
    %1241 = vmatpush1.bf16.msra.mxu0 0
    %1242 = vmatprep.subr.bf16.mxu0 0
    %1243 = vmatpush1.bf16.msra.mxu0 0
    %1244 = vmatprep.subr.bf16.mxu0 0
    %1245 = vmatpush1.bf16.msra.mxu0 0
    %1246 = vmatprep.subr.bf16.mxu0 0
    %1247 = vmatpush1.bf16.msra.mxu0 0
    %1248 = vmatprep.subr.bf16.mxu0 0
    %1249 = vmatpush1.bf16.msra.mxu0 0
    %1250 = vmatprep.subr.bf16.mxu0 0
    %1251 = vmatpush1.bf16.msra.mxu0 0
    %1252 = vmatprep.subr.bf16.mxu0 0
    %1253 = vmatpush1.bf16.msra.mxu0 0
    %1254 = vmatprep.subr.bf16.mxu0 0
    %1255 = vmatpush1.bf16.msra.mxu0 0
    %1256 = vmatprep.subr.bf16.mxu0 0
    %1257 = vmatpush1.bf16.msra.mxu0 0
    %1258 = vmatprep.mubr.bf16.mxu0 0
    %1259 = vmatmul.mubr.bf16.gmra.mrb[0].mxu0 %v1215
    %v1260 = vpop.f32.mrb[0].mxu0
    %v1261 = vadd.f32 0.0, %v1260
    %v1262 = vpop.f32.mrb[0].mxu0
    %v1263 = vpop.f32.mrb[0].mxu0
    %v1264 = vadd.f32 0.0, %v1263
    %v1265 = vpop.f32.mrb[0].mxu0
    %1266 = vmatprep.mubr.bf16.mxu0 0
    %1267 = vmatmul.mubr.bf16.gmra.mrb[0].mxu0 %v1218
    %v1268 = vpop.f32.mrb[0].mxu0
    %v1269 = vadd.f32 0.0, %v1268
    %v1270 = vpop.f32.mrb[0].mxu0
    %v1271 = vpop.f32.mrb[0].mxu0
    %v1272 = vadd.f32 0.0, %v1271
    %v1273 = vpop.f32.mrb[0].mxu0
    %1274 = vmatprep.mubr.bf16.mxu0 0
    %1275 = vmatmul.mubr.bf16.gmra.mrb[0].mxu0 %v1221
    %v1276 = vpop.f32.mrb[0].mxu0
    %v1277 = vadd.f32 0.0, %v1276
    %v1278 = vpop.f32.mrb[0].mxu0
    %v1279 = vpop.f32.mrb[0].mxu0
    %v1280 = vadd.f32 0.0, %v1279
    %v1281 = vpop.f32.mrb[0].mxu0
    %1282 = vmatprep.mubr.bf16.mxu0 0
    %1283 = vmatmul.mubr.bf16.gmra.mrb[0].mxu0 %v1224
    %v1284 = vpop.f32.mrb[0].mxu0
    %v1285 = vadd.f32 0.0, %v1284
    %v1286 = vpop.f32.mrb[0].mxu0
    %v1287 = vpop.f32.mrb[0].mxu0
    %v1288 = vadd.f32 0.0, %v1287
    %v1289 = vpop.f32.mrb[0].mxu0
    %1290 = vdwg.mxu0
    %v1291 = vmul.f32 %v1261, %v1124
    %v1292 = vmul.f32 %v1264, %v1125
    %v1293 = vmul.f32 %v1269, %v1126
    %v1294 = vmul.f32 %v1272, %v1127
    %v1295 = vmul.f32 %v1277, %v1128
    %v1296 = vmul.f32 %v1280, %v1129
    %v1297 = vmul.f32 %v1285, %v1130
    %v1298 = vmul.f32 %v1288, %v1131
    %v1299 = vld [vmem:[%s9 + $0x1] sm:$0x1]
    %v1300 = vlaneseq
    %v1301 = vshrl.u32 %v1300, 7
    %v1302 = vsub.s32 0, %v1301
    %v1303 = vrot.slane %v1299, %v1302
    %v1304 = vadd.f32 %v1291, %v1303
    %v1305 = vadd.f32 %v1292, %v1303
    %v1306 = vadd.f32 %v1293, %v1303
    %v1307 = vadd.f32 %v1294, %v1303
    %v1308 = vadd.f32 %v1295, %v1303
    %v1309 = vadd.f32 %v1296, %v1303
    %v1310 = vadd.f32 %v1297, %v1303
    %v1311 = vadd.f32 %v1298, %v1303
    %v1312 = vpack.c.bf16 %v1305, %v1304
    %v1313 = vpack.c.bf16 %v1307, %v1306
    %v1314 = vpack.c.bf16 %v1309, %v1308
    %v1315 = vpack.c.bf16 %v1311, %v1310
    %v1316 = vld [vmem:[#allocation7 + $0x4] sm:$0xf]
    %v1317 = vld [vmem:[#allocation7 + $0xc] sm:$0xf]
    %v1318 = vld [vmem:[#allocation7 + $0x14] sm:$0xf]
    %v1319 = vld [vmem:[#allocation7 + $0x1c] sm:$0xf]
    %v1320 = vld [vmem:[#allocation7 + $0x24] sm:$0xf]
    %v1321 = vld [vmem:[#allocation7 + $0x2c] sm:$0xf]
    %v1322 = vld [vmem:[#allocation7 + $0x34] sm:$0xf]
    %v1323 = vld [vmem:[#allocation7 + $0x3c] sm:$0xf]
    %v1324 = vld [vmem:[%s10 + $0x1] sm:$0x1]
    %v1326 = vlaneseq
    %v1327 = vshrl.u32 %v1326, 7
    %v1328 = vsub.s32 0, %v1327
    %v1329 = vrot.slane %v1324, %v1328
    %v1339 = vunpack.c.l.b16 %v1316
    %v1340 = vunpack.c.l.b16 %v1317
    %v1341 = vunpack.c.l.b16 %v1318
    %v1342 = vunpack.c.l.b16 %v1319
    %v1343 = vunpack.c.l.b16 %v1320
    %v1344 = vunpack.c.l.b16 %v1321
    %v1345 = vunpack.c.l.b16 %v1322
    %v1346 = vunpack.c.l.b16 %v1323
    %v1347 = vpack.c.b16 %v1340, %v1339
    %v1348 = vpack.c.b16 %v1342, %v1341
    %v1349 = vpack.c.b16 %v1344, %v1343
    %v1350 = vpack.c.b16 %v1346, %v1345
    %v1356 = vsel %vm164, %v1312, 0
    %v1359 = vsel %vm164, %v1313, 0
    %v1362 = vsel %vm164, %v1314, 0
    %v1365 = vsel %vm164, %v1315, 0
    %1367 = vmatprep.subr.bf16.mxu0 0
    %1368 = vmatpush1.bf16.msra.mxu0 %v1347
    %1369 = vmatprep.subr.bf16.mxu0 0
    %1370 = vmatpush1.bf16.msra.mxu0 %v1348
    %1371 = vmatprep.subr.bf16.mxu0 0
    %1372 = vmatpush1.bf16.msra.mxu0 %v1349
    %1373 = vmatprep.subr.bf16.mxu0 0
    %1374 = vmatpush1.bf16.msra.mxu0 %v1350
    %1375 = vmatprep.subr.bf16.mxu0 0
    %1376 = vmatpush1.bf16.msra.mxu0 0
    %1377 = vmatprep.subr.bf16.mxu0 0
    %1378 = vmatpush1.bf16.msra.mxu0 0
    %1379 = vmatprep.subr.bf16.mxu0 0
    %1380 = vmatpush1.bf16.msra.mxu0 0
    %1381 = vmatprep.subr.bf16.mxu0 0
    %1382 = vmatpush1.bf16.msra.mxu0 0
    %1383 = vmatprep.subr.bf16.mxu0 0
    %1384 = vmatpush1.bf16.msra.mxu0 0
    %1385 = vmatprep.subr.bf16.mxu0 0
    %1386 = vmatpush1.bf16.msra.mxu0 0
    %1387 = vmatprep.subr.bf16.mxu0 0
    %1388 = vmatpush1.bf16.msra.mxu0 0
    %1389 = vmatprep.subr.bf16.mxu0 0
    %1390 = vmatpush1.bf16.msra.mxu0 0
    %1391 = vmatprep.subr.bf16.mxu0 0
    %1392 = vmatpush1.bf16.msra.mxu0 0
    %1393 = vmatprep.subr.bf16.mxu0 0
    %1394 = vmatpush1.bf16.msra.mxu0 0
    %1395 = vmatprep.subr.bf16.mxu0 0
    %1396 = vmatpush1.bf16.msra.mxu0 0
    %1397 = vmatprep.subr.bf16.mxu0 0
    %1398 = vmatpush1.bf16.msra.mxu0 0
    %1399 = vmatprep.mubr.bf16.mxu0 0
    %1400 = vmatmul.mubr.bf16.gmra.mrb[0].mxu0 %v1356
    %v1401 = vpop.f32.mrb[0].mxu0
    %v1402 = vadd.f32 %v1329, %v1401
    %v1403 = vpop.f32.mrb[0].mxu0
    %v1404 = vpop.f32.mrb[0].mxu0
    %v1405 = vadd.f32 %v1329, %v1404
    %v1406 = vpop.f32.mrb[0].mxu0
    %1407 = vmatprep.mubr.bf16.mxu0 0
    %1408 = vmatmul.mubr.bf16.gmra.mrb[0].mxu0 %v1359
    %v1409 = vpop.f32.mrb[0].mxu0
    %v1410 = vadd.f32 %v1329, %v1409
    %v1411 = vpop.f32.mrb[0].mxu0
    %v1412 = vpop.f32.mrb[0].mxu0
    %v1413 = vadd.f32 %v1329, %v1412
    %v1414 = vpop.f32.mrb[0].mxu0
    %1415 = vmatprep.mubr.bf16.mxu0 0
    %1416 = vmatmul.mubr.bf16.gmra.mrb[0].mxu0 %v1362
    %v1417 = vpop.f32.mrb[0].mxu0
    %v1418 = vadd.f32 %v1329, %v1417
    %v1419 = vpop.f32.mrb[0].mxu0
    %v1420 = vpop.f32.mrb[0].mxu0
    %v1421 = vadd.f32 %v1329, %v1420
    %v1422 = vpop.f32.mrb[0].mxu0
    %1423 = vmatprep.mubr.bf16.mxu0 0
    %1424 = vmatmul.mubr.bf16.gmra.mrb[0].mxu0 %v1365
    %v1425 = vpop.f32.mrb[0].mxu0
    %v1426 = vadd.f32 %v1329, %v1425
    %v1427 = vpop.f32.mrb[0].mxu0
    %v1428 = vpop.f32.mrb[0].mxu0
    %v1429 = vadd.f32 %v1329, %v1428
    %v1430 = vpop.f32.mrb[0].mxu0
    %1431 = vdwg.mxu0
    %v1432 = vpack.c.bf16 %v1405, %v1402
    %v1433 = vpack.c.bf16 %v1413, %v1410
    %v1434 = vpack.c.bf16 %v1421, %v1418
    %v1435 = vpack.c.bf16 %v1429, %v1426
    %1436 = vmatprep.subr.bf16.mxu0 %v451
    %1437 = vmatpush1.bf16.msra.mxu0 %v450
    %1438 = vmatprep.subr.bf16.mxu0 %v453
    %1439 = vmatpush1.bf16.msra.mxu0 %v452
    %1440 = vmatprep.subr.bf16.mxu0 %v455
    %1441 = vmatpush1.bf16.msra.mxu0 %v454
    %1442 = vmatprep.subr.bf16.mxu0 %v457
    %1443 = vmatpush1.bf16.msra.mxu0 %v456
    %1444 = vmatprep.subr.bf16.mxu0 %v459
    %1445 = vmatpush1.bf16.msra.mxu0 %v458
    %1446 = vmatprep.subr.bf16.mxu0 %v461
    %1447 = vmatpush1.bf16.msra.mxu0 %v460
    %1448 = vmatprep.subr.bf16.mxu0 %v463
    %1449 = vmatpush1.bf16.msra.mxu0 %v462
    %1450 = vmatprep.subr.bf16.mxu0 %v465
    %1451 = vmatpush1.bf16.msra.mxu0 %v464
    %1452 = vmatprep.subr.bf16.mxu0 0
    %1453 = vmatpush1.bf16.msra.mxu0 0
    %1454 = vmatprep.subr.bf16.mxu0 0
    %1455 = vmatpush1.bf16.msra.mxu0 0
    %1456 = vmatprep.subr.bf16.mxu0 0
    %1457 = vmatpush1.bf16.msra.mxu0 0
    %1458 = vmatprep.subr.bf16.mxu0 0
    %1459 = vmatpush1.bf16.msra.mxu0 0
    %1460 = vmatprep.subr.bf16.mxu0 0
    %1461 = vmatpush1.bf16.msra.mxu0 0
    %1462 = vmatprep.subr.bf16.mxu0 0
    %1463 = vmatpush1.bf16.msra.mxu0 0
    %1464 = vmatprep.subr.bf16.mxu0 0
    %1465 = vmatpush1.bf16.msra.mxu0 0
    %1466 = vmatprep.subr.bf16.mxu0 0
    %1467 = vmatpush1.bf16.msra.mxu0 0
    %1468 = vmatprep.mubr.bf16.mxu0 0
    %1469 = vmatmul.mubr.bf16.gmra.mrb[0].mxu0 %v1432
    %v1470 = vpop.f32.mrb[0].mxu0
    %v1471 = vadd.f32 %v395, %v1470
    %v1472 = vpop.f32.mrb[0].mxu0
    %v1473 = vadd.f32 %v399, %v1472
    %v1474 = vpop.f32.mrb[0].mxu0
    %v1475 = vadd.f32 %v395, %v1474
    %v1476 = vpop.f32.mrb[0].mxu0
    %v1477 = vadd.f32 %v399, %v1476
    %1478 = vmatprep.mubr.bf16.mxu0 0
    %1479 = vmatmul.mubr.bf16.gmra.mrb[0].mxu0 %v1433
    %v1480 = vpop.f32.mrb[0].mxu0
    %v1481 = vadd.f32 %v395, %v1480
    %v1482 = vpop.f32.mrb[0].mxu0
    %v1483 = vadd.f32 %v399, %v1482
    %v1484 = vpop.f32.mrb[0].mxu0
    %v1485 = vadd.f32 %v395, %v1484
    %v1486 = vpop.f32.mrb[0].mxu0
    %v1487 = vadd.f32 %v399, %v1486
    %1488 = vmatprep.mubr.bf16.mxu0 0
    %1489 = vmatmul.mubr.bf16.gmra.mrb[0].mxu0 %v1434
    %v1490 = vpop.f32.mrb[0].mxu0
    %v1491 = vadd.f32 %v395, %v1490
    %v1492 = vpop.f32.mrb[0].mxu0
    %v1493 = vadd.f32 %v399, %v1492
    %v1494 = vpop.f32.mrb[0].mxu0
    %v1495 = vadd.f32 %v395, %v1494
    %v1496 = vpop.f32.mrb[0].mxu0
    %v1497 = vadd.f32 %v399, %v1496
    %1498 = vmatprep.mubr.bf16.mxu0 0
    %1499 = vmatmul.mubr.bf16.gmra.mrb[0].mxu0 %v1435
    %v1500 = vpop.f32.mrb[0].mxu0
    %v1501 = vadd.f32 %v395, %v1500
    %v1502 = vpop.f32.mrb[0].mxu0
    %v1503 = vadd.f32 %v399, %v1502
    %v1504 = vpop.f32.mrb[0].mxu0
    %v1505 = vadd.f32 %v395, %v1504
    %v1506 = vpop.f32.mrb[0].mxu0
    %v1507 = vadd.f32 %v399, %v1506
    %1508 = vdwg.mxu0
    %v1509 = vtanh.pop %v1471
    %v1510 = vtanh.pop %v1473
    %v1511 = vtanh.pop %v1475
    %v1512 = vtanh.pop %v1477
    %v1513 = vtanh.pop %v1481
    %v1514 = vtanh.pop %v1483
    %v1515 = vtanh.pop %v1485
    %v1516 = vtanh.pop %v1487
    %v1517 = vtanh.pop %v1491
    %v1518 = vtanh.pop %v1493
    %v1519 = vtanh.pop %v1495
    %v1520 = vtanh.pop %v1497
    %v1521 = vtanh.pop %v1501
    %v1522 = vtanh.pop %v1503
    %v1523 = vtanh.pop %v1505
    %v1524 = vtanh.pop %v1507
    %1525 = vmatprep.subr.bf16.mxu0 %v648
    %1526 = vmatpush1.bf16.msra.mxu0 %v647
    %1527 = vmatprep.subr.bf16.mxu0 %v650
    %1528 = vmatpush1.bf16.msra.mxu0 %v649
    %1529 = vmatprep.subr.bf16.mxu0 %v652
    %1530 = vmatpush1.bf16.msra.mxu0 %v651
    %1531 = vmatprep.subr.bf16.mxu0 %v654
    %1532 = vmatpush1.bf16.msra.mxu0 %v653
    %1533 = vmatprep.subr.bf16.mxu0 %v656
    %1534 = vmatpush1.bf16.msra.mxu0 %v655
    %1535 = vmatprep.subr.bf16.mxu0 %v658
    %1536 = vmatpush1.bf16.msra.mxu0 %v657
    %1537 = vmatprep.subr.bf16.mxu0 %v660
    %1538 = vmatpush1.bf16.msra.mxu0 %v659
    %1539 = vmatprep.subr.bf16.mxu0 %v662
    %1540 = vmatpush1.bf16.msra.mxu0 %v661
    %1541 = vmatprep.subr.bf16.mxu0 0
    %1542 = vmatpush1.bf16.msra.mxu0 0
    %1543 = vmatprep.subr.bf16.mxu0 0
    %1544 = vmatpush1.bf16.msra.mxu0 0
    %1545 = vmatprep.subr.bf16.mxu0 0
    %1546 = vmatpush1.bf16.msra.mxu0 0
    %1547 = vmatprep.subr.bf16.mxu0 0
    %1548 = vmatpush1.bf16.msra.mxu0 0
    %1549 = vmatprep.subr.bf16.mxu0 0
    %1550 = vmatpush1.bf16.msra.mxu0 0
    %1551 = vmatprep.subr.bf16.mxu0 0
    %1552 = vmatpush1.bf16.msra.mxu0 0
    %1553 = vmatprep.subr.bf16.mxu0 0
    %1554 = vmatpush1.bf16.msra.mxu0 0
    %1555 = vmatprep.subr.bf16.mxu0 0
    %1556 = vmatpush1.bf16.msra.mxu0 0
    %1557 = vmatprep.mubr.bf16.mxu0 0
    %1558 = vmatmul.mubr.bf16.gmra.mrb[0].mxu0 %v1432
    %v1559 = vpop.f32.mrb[0].mxu0
    %v1560 = vadd.f32 %v592, %v1559
    %v1561 = vpop.f32.mrb[0].mxu0
    %v1562 = vadd.f32 %v596, %v1561
    %v1563 = vpop.f32.mrb[0].mxu0
    %v1564 = vadd.f32 %v592, %v1563
    %v1565 = vpop.f32.mrb[0].mxu0
    %v1566 = vadd.f32 %v596, %v1565
    %1567 = vmatprep.mubr.bf16.mxu0 0
    %1568 = vmatmul.mubr.bf16.gmra.mrb[0].mxu0 %v1433
    %v1569 = vpop.f32.mrb[0].mxu0
    %v1570 = vadd.f32 %v592, %v1569
    %v1571 = vpop.f32.mrb[0].mxu0
    %v1572 = vadd.f32 %v596, %v1571
    %v1573 = vpop.f32.mrb[0].mxu0
    %v1574 = vadd.f32 %v592, %v1573
    %v1575 = vpop.f32.mrb[0].mxu0
    %v1576 = vadd.f32 %v596, %v1575
    %1577 = vmatprep.mubr.bf16.mxu0 0
    %1578 = vmatmul.mubr.bf16.gmra.mrb[0].mxu0 %v1434
    %v1579 = vpop.f32.mrb[0].mxu0
    %v1580 = vadd.f32 %v592, %v1579
    %v1581 = vpop.f32.mrb[0].mxu0
    %v1582 = vadd.f32 %v596, %v1581
    %v1583 = vpop.f32.mrb[0].mxu0
    %v1584 = vadd.f32 %v592, %v1583
    %v1585 = vpop.f32.mrb[0].mxu0
    %v1586 = vadd.f32 %v596, %v1585
    %1587 = vmatprep.mubr.bf16.mxu0 0
    %1588 = vmatmul.mubr.bf16.gmra.mrb[0].mxu0 %v1435
    %v1589 = vpop.f32.mrb[0].mxu0
    %v1590 = vadd.f32 %v592, %v1589
    %v1591 = vpop.f32.mrb[0].mxu0
    %v1592 = vadd.f32 %v596, %v1591
    %v1593 = vpop.f32.mrb[0].mxu0
    %v1594 = vadd.f32 %v592, %v1593
    %v1595 = vpop.f32.mrb[0].mxu0
    %v1596 = vadd.f32 %v596, %v1595
    %1597 = vdwg.mxu0
    %v1598 = vxor.u32 %v1560, 2147483648
    %v1599 = vxor.u32 %v1562, 2147483648
    %v1600 = vxor.u32 %v1564, 2147483648
    %v1601 = vxor.u32 %v1566, 2147483648
    %v1602 = vxor.u32 %v1570, 2147483648
    %v1603 = vxor.u32 %v1572, 2147483648
    %v1604 = vxor.u32 %v1574, 2147483648
    %v1605 = vxor.u32 %v1576, 2147483648
    %v1606 = vxor.u32 %v1580, 2147483648
    %v1607 = vxor.u32 %v1582, 2147483648
    %v1608 = vxor.u32 %v1584, 2147483648
    %v1609 = vxor.u32 %v1586, 2147483648
    %v1610 = vxor.u32 %v1590, 2147483648
    %v1611 = vxor.u32 %v1592, 2147483648
    %v1612 = vxor.u32 %v1594, 2147483648
    %v1613 = vxor.u32 %v1596, 2147483648
    %v1614 = vmul.f32 %v1598, 1.442695
    %v1615 = vpow.pop %v1614
    %v1616 = vmul.f32 %v1599, 1.442695
    %v1617 = vpow.pop %v1616
    %v1618 = vmul.f32 %v1600, 1.442695
    %v1619 = vpow.pop %v1618
    %v1620 = vmul.f32 %v1601, 1.442695
    %v1621 = vpow.pop %v1620
    %v1622 = vmul.f32 %v1602, 1.442695
    %v1623 = vpow.pop %v1622
    %v1624 = vmul.f32 %v1603, 1.442695
    %v1625 = vpow.pop %v1624
    %v1626 = vmul.f32 %v1604, 1.442695
    %v1627 = vpow.pop %v1626
    %v1628 = vmul.f32 %v1605, 1.442695
    %v1629 = vpow.pop %v1628
    %v1630 = vmul.f32 %v1606, 1.442695
    %v1631 = vpow.pop %v1630
    %v1632 = vmul.f32 %v1607, 1.442695
    %v1633 = vpow.pop %v1632
    %v1634 = vmul.f32 %v1608, 1.442695
    %v1635 = vpow.pop %v1634
    %v1636 = vmul.f32 %v1609, 1.442695
    %v1637 = vpow.pop %v1636
    %v1638 = vmul.f32 %v1610, 1.442695
    %v1639 = vpow.pop %v1638
    %v1640 = vmul.f32 %v1611, 1.442695
    %v1641 = vpow.pop %v1640
    %v1642 = vmul.f32 %v1612, 1.442695
    %v1643 = vpow.pop %v1642
    %v1644 = vmul.f32 %v1613, 1.442695
    %v1645 = vpow.pop %v1644
    %v1646 = vadd.f32 %v1615, 1.0
    %v1647 = vadd.f32 %v1617, 1.0
    %v1648 = vadd.f32 %v1619, 1.0
    %v1649 = vadd.f32 %v1621, 1.0
    %v1650 = vadd.f32 %v1623, 1.0
    %v1651 = vadd.f32 %v1625, 1.0
    %v1652 = vadd.f32 %v1627, 1.0
    %v1653 = vadd.f32 %v1629, 1.0
    %v1654 = vadd.f32 %v1631, 1.0
    %v1655 = vadd.f32 %v1633, 1.0
    %v1656 = vadd.f32 %v1635, 1.0
    %v1657 = vadd.f32 %v1637, 1.0
    %v1658 = vadd.f32 %v1639, 1.0
    %v1659 = vadd.f32 %v1641, 1.0
    %v1660 = vadd.f32 %v1643, 1.0
    %v1661 = vadd.f32 %v1645, 1.0
    %v1662 = vrcp.pop %v1646
    %v1663 = vmul.f32 1.0, %v1662
    %v1664 = vrcp.pop %v1647
    %v1665 = vmul.f32 1.0, %v1664
    %v1666 = vrcp.pop %v1648
    %v1667 = vmul.f32 1.0, %v1666
    %v1668 = vrcp.pop %v1649
    %v1669 = vmul.f32 1.0, %v1668
    %v1670 = vrcp.pop %v1650
    %v1671 = vmul.f32 1.0, %v1670
    %v1672 = vrcp.pop %v1651
    %v1673 = vmul.f32 1.0, %v1672
    %v1674 = vrcp.pop %v1652
    %v1675 = vmul.f32 1.0, %v1674
    %v1676 = vrcp.pop %v1653
    %v1677 = vmul.f32 1.0, %v1676
    %v1678 = vrcp.pop %v1654
    %v1679 = vmul.f32 1.0, %v1678
    %v1680 = vrcp.pop %v1655
    %v1681 = vmul.f32 1.0, %v1680
    %v1682 = vrcp.pop %v1656
    %v1683 = vmul.f32 1.0, %v1682
    %v1684 = vrcp.pop %v1657
    %v1685 = vmul.f32 1.0, %v1684
    %v1686 = vrcp.pop %v1658
    %v1687 = vmul.f32 1.0, %v1686
    %v1688 = vrcp.pop %v1659
    %v1689 = vmul.f32 1.0, %v1688
    %v1690 = vrcp.pop %v1660
    %v1691 = vmul.f32 1.0, %v1690
    %v1692 = vrcp.pop %v1661
    %v1693 = vmul.f32 1.0, %v1692
    %v1694 = vmul.f32 %v1509, %v1663
    %v1695 = vmul.f32 %v1510, %v1665
    %v1696 = vmul.f32 %v1511, %v1667
    %v1697 = vmul.f32 %v1512, %v1669
    %v1698 = vmul.f32 %v1513, %v1671
    %v1699 = vmul.f32 %v1514, %v1673
    %v1700 = vmul.f32 %v1515, %v1675
    %v1701 = vmul.f32 %v1516, %v1677
    %v1702 = vmul.f32 %v1517, %v1679
    %v1703 = vmul.f32 %v1518, %v1681
    %v1704 = vmul.f32 %v1519, %v1683
    %v1705 = vmul.f32 %v1520, %v1685
    %v1706 = vmul.f32 %v1521, %v1687
    %v1707 = vmul.f32 %v1522, %v1689
    %v1708 = vmul.f32 %v1523, %v1691
    %v1709 = vmul.f32 %v1524, %v1693
    %v1710 = vpack.c.bf16 %v1696, %v1694
    %v1711 = vpack.c.bf16 %v1697, %v1695
    %v1712 = vpack.c.bf16 %v1700, %v1698
    %v1713 = vpack.c.bf16 %v1701, %v1699
    %v1714 = vpack.c.bf16 %v1704, %v1702
    %v1715 = vpack.c.bf16 %v1705, %v1703
    %v1716 = vpack.c.bf16 %v1708, %v1706
    %v1717 = vpack.c.bf16 %v1709, %v1707
    %1718 = vmatprep.subr.bf16.mxu0 %v1711
    %1719 = vmatpush1.bf16.xpose.msra.mxu0 %v1710
    %1720 = vmatprep.subr.bf16.mxu0 %v1713
    %1721 = vmatpush1.bf16.xpose.msra.mxu0 %v1712
    %1722 = vmatprep.subr.bf16.mxu0 %v1715
    %1723 = vmatpush1.bf16.xpose.msra.mxu0 %v1714
    %1724 = vmatprep.subr.bf16.mxu0 %v1717
    %1725 = vmatpush1.bf16.xpose.msra.mxu0 %v1716
    %1726 = vmatprep.subr.bf16.mxu0 0
    %1727 = vmatpush1.bf16.xpose.msra.mxu0 0
    %1728 = vmatprep.subr.bf16.mxu0 0
    %1729 = vmatpush1.bf16.xpose.msra.mxu0 0
    %1730 = vmatprep.subr.bf16.mxu0 0
    %1731 = vmatpush1.bf16.xpose.msra.mxu0 0
    %1732 = vmatprep.subr.bf16.mxu0 0
    %1733 = vmatpush1.bf16.xpose.msra.mxu0 0
    %1734 = vmatprep.subr.bf16.mxu0 0
    %1735 = vmatpush1.bf16.xpose.msra.mxu0 0
    %1736 = vmatprep.subr.bf16.mxu0 0
    %1737 = vmatpush1.bf16.xpose.msra.mxu0 0
    %1738 = vmatprep.subr.bf16.mxu0 0
    %1739 = vmatpush1.bf16.xpose.msra.mxu0 0
    %1740 = vmatprep.subr.bf16.mxu0 0
    %1741 = vmatpush1.bf16.xpose.msra.mxu0 0
    %1742 = vmatprep.subr.bf16.mxu0 0
    %1743 = vmatpush1.bf16.xpose.msra.mxu0 0
    %1744 = vmatprep.subr.bf16.mxu0 0
    %1745 = vmatpush1.bf16.xpose.msra.mxu0 0
    %1746 = vmatprep.subr.bf16.mxu0 0
    %1747 = vmatpush1.bf16.xpose.msra.mxu0 0
    %1748 = vmatprep.subr.bf16.mxu0 0
    %1749 = vmatpush1.bf16.xpose.msra.mxu0 0
    %1750 = vmatprep.mubr.bf16.mxu0 %v895
    %1751 = vmatmul.mubr.bf16.gmra.mrb[0].mxu0 %v888
    %v1752 = vpop.f32.mrb[0].mxu0
    %v1753 = vadd.f32 0.0, %v1752
    %v1754 = vpop.f32.mrb[0].mxu0
    %v1755 = vpop.f32.mrb[0].mxu0
    %v1756 = vpop.f32.mrb[0].mxu0
    %1757 = vdwg.mxu0
    %v1758 = vlaneseq
    %v1759 = vshrl.u32 %v1758, 7
    %v1760 = vsub.s32 0, %v1759
    %v1761 = vrot.slane %v1753, %v1760
    %v1762 = vsel %vm938, %v1761, -1e+30
    %v1763 = vsel %vm944, %v1762, -inf
    %1764 = vmax.xlane.f32.xlu0 %v1763
    %v1765 = vpop.xlane.xlu0 %1764
    %v1766 = vsub.f32 %v1762, %v1765
    %v1767 = vmul.f32 %v1766, 1.442695
    %v1768 = vpow.pop %v1767
    %v1769 = vsel %vm938, %v1768, 0.0
    %v1770 = vsel %vm944, %v1769, 0.0
    %1771 = vadd.xlane.f32.xlu0 %v1770
    %v1772 = vpop.xlane.xlu0 %1771
    %vm1773 = vcmp.gt.f32.partialorder %v1772, 0.0
    %v1774 = vrcp.pop %v1772
    %v1775 = vsel %vm1773, %v1774, 0.0
    %v1776 = vmul.f32 %v1769, %v1775
    %v1777 = vpack.c.bf16 %v1776, %v1776
    %v1779 = vsel %vm164, %v1777, 0
    %1781 = vmatprep.subr.bf16.mxu0 0
    %1782 = vmatpush1.bf16.msra.mxu0 %v1432
    %1783 = vmatprep.subr.bf16.mxu0 0
    %1784 = vmatpush1.bf16.msra.mxu0 %v1433
    %1785 = vmatprep.subr.bf16.mxu0 0
    %1786 = vmatpush1.bf16.msra.mxu0 %v1434
    %1787 = vmatprep.subr.bf16.mxu0 0
    %1788 = vmatpush1.bf16.msra.mxu0 %v1435
    %1789 = vmatprep.subr.bf16.mxu0 0
    %1790 = vmatpush1.bf16.msra.mxu0 0
    %1791 = vmatprep.subr.bf16.mxu0 0
    %1792 = vmatpush1.bf16.msra.mxu0 0
    %1793 = vmatprep.subr.bf16.mxu0 0
    %1794 = vmatpush1.bf16.msra.mxu0 0
    %1795 = vmatprep.subr.bf16.mxu0 0
    %1796 = vmatpush1.bf16.msra.mxu0 0
    %1797 = vmatprep.subr.bf16.mxu0 0
    %1798 = vmatpush1.bf16.msra.mxu0 0
    %1799 = vmatprep.subr.bf16.mxu0 0
    %1800 = vmatpush1.bf16.msra.mxu0 0
    %1801 = vmatprep.subr.bf16.mxu0 0
    %1802 = vmatpush1.bf16.msra.mxu0 0
    %1803 = vmatprep.subr.bf16.mxu0 0
    %1804 = vmatpush1.bf16.msra.mxu0 0
    %1805 = vmatprep.subr.bf16.mxu0 0
    %1806 = vmatpush1.bf16.msra.mxu0 0
    %1807 = vmatprep.subr.bf16.mxu0 0
    %1808 = vmatpush1.bf16.msra.mxu0 0
    %1809 = vmatprep.subr.bf16.mxu0 0
    %1810 = vmatpush1.bf16.msra.mxu0 0
    %1811 = vmatprep.subr.bf16.mxu0 0
    %1812 = vmatpush1.bf16.msra.mxu0 0
    %1813 = vmatprep.mubr.bf16.mxu0 0
    %1814 = vmatmul.mubr.bf16.gmra.mrb[0].mxu0 %v1779
    %v1815 = vpop.f32.mrb[0].mxu0
    %v1816 = vadd.f32 0.0, %v1815
    %v1817 = vpop.f32.mrb[0].mxu0
    %v1818 = vpop.f32.mrb[0].mxu0
    %v1819 = vpop.f32.mrb[0].mxu0
    %1820 = vdwg.mxu0
    %v1822 = vsel %vm164, %v959, 0
    %1824 = vmatprep.subr.bf16.mxu0 0
    %1825 = vmatpush1.bf16.msra.mxu0 %v370
    %1826 = vmatprep.subr.bf16.mxu0 0
    %1827 = vmatpush1.bf16.msra.mxu0 %v371
    %1828 = vmatprep.subr.bf16.mxu0 0
    %1829 = vmatpush1.bf16.msra.mxu0 %v372
    %1830 = vmatprep.subr.bf16.mxu0 0
    %1831 = vmatpush1.bf16.msra.mxu0 %v373
    %1832 = vmatprep.subr.bf16.mxu0 0
    %1833 = vmatpush1.bf16.msra.mxu0 0
    %1834 = vmatprep.subr.bf16.mxu0 0
    %1835 = vmatpush1.bf16.msra.mxu0 0
    %1836 = vmatprep.subr.bf16.mxu0 0
    %1837 = vmatpush1.bf16.msra.mxu0 0
    %1838 = vmatprep.subr.bf16.mxu0 0
    %1839 = vmatpush1.bf16.msra.mxu0 0
    %1840 = vmatprep.subr.bf16.mxu0 0
    %1841 = vmatpush1.bf16.msra.mxu0 0
    %1842 = vmatprep.subr.bf16.mxu0 0
    %1843 = vmatpush1.bf16.msra.mxu0 0
    %1844 = vmatprep.subr.bf16.mxu0 0
    %1845 = vmatpush1.bf16.msra.mxu0 0
    %1846 = vmatprep.subr.bf16.mxu0 0
    %1847 = vmatpush1.bf16.msra.mxu0 0
    %1848 = vmatprep.subr.bf16.mxu0 0
    %1849 = vmatpush1.bf16.msra.mxu0 0
    %1850 = vmatprep.subr.bf16.mxu0 0
    %1851 = vmatpush1.bf16.msra.mxu0 0
    %1852 = vmatprep.subr.bf16.mxu0 0
    %1853 = vmatpush1.bf16.msra.mxu0 0
    %1854 = vmatprep.subr.bf16.mxu0 0
    %1855 = vmatpush1.bf16.msra.mxu0 0
    %1856 = vmatprep.mubr.bf16.mxu0 0
    %1857 = vmatmul.mubr.bf16.gmra.mrb[0].mxu0 %v1822
    %v1858 = vpop.f32.mrb[0].mxu0
    %v1859 = vadd.f32 %v1816, %v1858
    %v1860 = vpop.f32.mrb[0].mxu0
    %v1861 = vpop.f32.mrb[0].mxu0
    %v1862 = vpop.f32.mrb[0].mxu0
    %1863 = vdwg.mxu0
    %1864 = vst [vmem:[#allocation10] sm:$0xf] %v1859
    // Predicated region
    $region66: #{tpu_custom_call.1} parent=1 // pred_check
      _
    $region67: #{tpu_custom_call.1} parent=1 // pred_check_branch
      %1866 = sbr.rel (0) target = $region69
    $region68: #{tpu_custom_call.1} parent=1 // pred_region
      %s1868 = ssub.s32 64, 64
      %1869 = vsyncadd [#allocation4], %s1868
      %s1871 = sshll.u32 [#allocation10], 4
      %s1872 = int_to_ptr.vmem [resolvable:$true] %s1871
      %1874 = dma.vmem_to_hbm [thread:$0]  %s1872, 64, %s12, [#allocation4]
    $region69: #{tpu_custom_call.1} parent=1 // pred_fallthru
      _
    // Predicated region
    $region70: #{tpu_custom_call.1} parent=1 // pred_check
      _
    $region71: #{tpu_custom_call.1} parent=1 // pred_check_branch
      %1876 = sbr.rel (0) target = $region73
    $region72: #{tpu_custom_call.1} parent=1 // pred_region
      %1877 = dma.done [#allocation4], 64
    $region73: #{tpu_custom_call.1} parent=1 // pred_fallthru
      _
    %1878 = vsyncpa [#allocation3], 1
    %1879 = vsyncpa [#allocation6], 1
    %1880 = vsyncpa [#allocation9], 1
    %1881 = vsyncpa [#allocation4], 1

</llo_original>
